<compile_context>
chip_gen: v5e
topology: v5e:2x2
jax: 0.10.0
libtpu: 0.0.40
codegen_flags: <defaults>
</compile_context>

<pallas_src>
import functools

import jax
import jax.numpy as jnp
from jax.experimental import pallas as pl
from jax.experimental.pallas import tpu as pltpu


def _round_up(x, m):
    return ((x + m - 1) // m) * m


def _pad_gate_axis(w, h, hp):
    """Pad trailing 4*h gate axis so each of the 4 gate blocks is widened to hp."""
    lead = w.shape[:-1]
    w4 = w.reshape(lead + (4, h))
    pad = [(0, 0)] * (len(lead) + 1) + [(0, hp - h)]
    w4 = jnp.pad(w4, pad)
    return w4.reshape(lead + (4 * hp,))


# ---------------------------------------------------------------------------
# Fused LSTM kernel: per-chunk input projection + serial recurrence
# ---------------------------------------------------------------------------
def _fused_lstm_kernel(x_ref, wih_ref, whh_ref, b_ref, h0_ref, c0_ref, hn_ref,
                       xw_scr, h_scr, c_scr, *, chunk, last_steps, n_chunks):
    # x_ref:   (chunk, Bp, D)    bf16 time-major input slab for this chunk
    # wih_ref: (D, 4Hp) bf16,  whh_ref: (Hp, 4Hp) bf16,  b_ref: (1, 4Hp) f32
    # h0/c0:   (Bp, Hp) f32 initial state;   hn_ref: (Bp, Hp) f32 final hidden
    # xw_scr:  (chunk, Bp, 4Hp) f32 per-chunk gates; h_scr/c_scr: (Bp, Hp) f32 carry
    ci = pl.program_id(0)
    bp = h_scr.shape[0]
    hp = h_scr.shape[1]
    d = x_ref.shape[-1]

    @pl.when(ci == 0)
    def _():
        h_scr[...] = h0_ref[...]
        c_scr[...] = c0_ref[...]

    # Chunk-parallel input projection: one bf16 MXU matmul, M = chunk*Bp rows, f32 acc.
    # Bp is sublane-aligned, so the leading-dim merge/split reshapes are layout-free.
    x2 = x_ref[...].reshape(chunk * bp, d)
    xw2 = jnp.dot(x2, wih_ref[...], preferred_element_type=jnp.float32) + b_ref[...]
    xw_scr[...] = xw2.reshape(chunk, bp, 4 * hp)

    whh = whh_ref[...]

    def step(s, h, c):
        # xw_scr[s] is a free leading-axis load; gate slices are full 128-lane blocks.
        gates = xw_scr[s] + jnp.dot(h.astype(jnp.bfloat16), whh,
                                    preferred_element_type=jnp.float32)
        i_g = jax.nn.sigmoid(gates[:, 0 * hp:1 * hp])
        f_g = jax.nn.sigmoid(gates[:, 1 * hp:2 * hp])
        g_g = jnp.tanh(gates[:, 2 * hp:3 * hp])
        o_g = jax.nn.sigmoid(gates[:, 3 * hp:4 * hp])
        c_n = f_g * c + i_g * g_g
        h_n = o_g * jnp.tanh(c_n)
        return h_n, c_n

    def run_steps(n):
        h = h_scr[...]                 # register carry within the chunk
        c = c_scr[...]
        for s in range(n):             # static unroll: LLO schedules across steps
            h, c = step(s, h, c)
        h_scr[...] = h
        c_scr[...] = c

    if last_steps == chunk:            # T divides evenly: single unmasked path
        run_steps(chunk)
    else:
        # Only the final chunk is ragged: run a shorter epilogue there instead of
        # paying per-step masking selects in every chunk.
        @pl.when(ci != n_chunks - 1)
        def _():
            run_steps(chunk)

        @pl.when(ci == n_chunks - 1)
        def _():
            run_steps(last_steps)

    @pl.when(ci == n_chunks - 1)
    def _():
        hn_ref[...] = h_scr[...]


class EncoderRNNPallas:
    """JAX/Pallas port of diffuser.models.encoder.EncoderRNN (num_layers=1)."""

    _LANE = 128
    _SUB = 16                      # bf16 sublane packing (also satisfies f32's 8)
    _VMEM_BUDGET = 24 * 1024 * 1024   # conservative vs. the 32 MiB scoped limit

    def __init__(self, input_dim, hidden_dim, num_layers=1, key=None, max_chunk=32):
        assert num_layers == 1, "only num_layers=1 implemented (module default)"
        self.input_dim = input_dim
        self.hidden_dim = hidden_dim
        self.num_layers = num_layers
        self.max_chunk = max_chunk

        if key is None:
            key = jax.random.PRNGKey(0)
        k = 1.0 / jnp.sqrt(hidden_dim)
        k1, k2, k3, k4 = jax.random.split(key, 4)
        # PyTorch nn.LSTM param shapes: W_ih (4H, D), W_hh (4H, H), b_* (4H,)
        w_ih = jax.random.uniform(k1, (4 * hidden_dim, input_dim), jnp.float32, -k, k)
        w_hh = jax.random.uniform(k2, (4 * hidden_dim, hidden_dim), jnp.float32, -k, k)
        b_ih = jax.random.uniform(k3, (4 * hidden_dim,), jnp.float32, -k, k)
        b_hh = jax.random.uniform(k4, (4 * hidden_dim,), jnp.float32, -k, k)

        # f32 master copies, "activations @ weights" layout (used by the reference).
        self.w_ih_t = w_ih.T                       # (D, 4H)
        self.w_hh_t = w_hh.T                       # (H, 4H)
        self.bias = (b_ih + b_hh)[None, :]         # (1, 4H)

        # Lane-aligned, gate-aligned padded kernel parameters (weights in bf16).
        H = hidden_dim
        Hp = _round_up(H, self._LANE)
        self.hidden_pad = Hp
        self.w_ih_p = _pad_gate_axis(self.w_ih_t, H, Hp).astype(jnp.bfloat16)  # (D,4Hp)
        w_hh_rows = jnp.pad(self.w_hh_t, ((0, Hp - H), (0, 0)))                # (Hp,4H)
        self.w_hh_p = _pad_gate_axis(w_hh_rows, H, Hp).astype(jnp.bfloat16)    # (Hp,4Hp)
        self.bias_p = _pad_gate_axis(self.bias, H, Hp)                          # (1,4Hp) f32

    # --- VMEM budgeting (review item: be explicit, portable to v7x's 64 MiB) ------
    def _pick_chunk(self, T, Bp):
        D, Hp = self.input_dim, self.hidden_pad
        g4 = 4 * Hp
        fixed = (2 * D * g4 * 2          # w_ih (double-buffered, bf16)
                 + 2 * Hp * g4 * 2       # w_hh
                 + 2 * g4 * 4            # bias
                 + 6 * Bp * Hp * 4       # h0 / c0 / hn buffers
                 + 2 * Bp * Hp * 4)      # h / c scratch

        def dyn(c):
            return (2 * c * Bp * D * 2   # x slab, double-buffered, bf16
                    + c * Bp * g4 * 4    # xw scratch (f32)
                    + 8 * Bp * g4 * 4)   # headroom for per-step temporaries

        chunk = min(self.max_chunk, T)
        while chunk > 8 and fixed + dyn(chunk) > self._VMEM_BUDGET:
            chunk = max(8, chunk - 8)
        if fixed + dyn(chunk) > self._VMEM_BUDGET:
            raise ValueError(
                "EncoderRNNPallas: resident weights/state need %d bytes of VMEM, over "
                "the %d-byte budget; this config requires K-tiling the input "
                "projection." % (fixed + dyn(chunk), self._VMEM_BUDGET))
        return chunk

    def __call__(self, x, hidden_state=None):
        # x: (B, T, D), batch_first like the PyTorch module.
        # TODO(synk): torch.nn.utils.rnn.PackedSequence inputs are not supported
        # (no JAX equivalent); dense batch_first tensors only.
        x = x.astype(jnp.float32)
        B, T, D = x.shape
        H, Hp = self.hidden_dim, self.hidden_pad
        Bp = _round_up(max(B, self._SUB), self._SUB)

        chunk = self._pick_chunk(T, Bp)
        n_chunks = -(-T // chunk)
        Tp = n_chunks * chunk
        last_steps = T - (n_chunks - 1) * chunk

        if hidden_state is None:
            h0 = jnp.zeros((Bp, Hp), jnp.float32)
            c0 = jnp.zeros((Bp, Hp), jnp.float32)
        else:
            h0_raw, c0_raw = hidden_state
            h0_raw = jnp.asarray(h0_raw).reshape(B, H).astype(jnp.float32)
            c0_raw = jnp.asarray(c0_raw).reshape(B, H).astype(jnp.float32)
            h0 = jnp.zeros((Bp, Hp), jnp.float32).at[:B, :H].set(h0_raw)
            c0 = jnp.zeros((Bp, Hp), jnp.float32).at[:B, :H].set(c0_raw)

        # One fused cast+transpose+pad of x to time-major bf16 (half the bytes of the
        # old f32 repack; the large gates intermediate is never materialized at all).
        x_tm = jnp.transpose(x.astype(jnp.bfloat16), (1, 0, 2))        # (T, B, D)
        if (Tp, Bp) != (T, B):
            x_tm = jnp.pad(x_tm, ((0, Tp - T), (0, Bp - B), (0, 0)))   # (Tp, Bp, D)

        hn_p = pl.pallas_call(
            functools.partial(_fused_lstm_kernel, chunk=chunk,
                              last_steps=last_steps, n_chunks=n_chunks),
            out_shape=jax.ShapeDtypeStruct((Bp, Hp), jnp.float32),
            grid=(n_chunks,),
            in_specs=[
                pl.BlockSpec((chunk, Bp, D), lambda i: (i, 0, 0)),   # x chunk (bf16)
                pl.BlockSpec((D, 4 * Hp), lambda i: (0, 0)),          # w_ih (bf16)
                pl.BlockSpec((Hp, 4 * Hp), lambda i: (0, 0)),         # w_hh (bf16)
                pl.BlockSpec((1, 4 * Hp), lambda i: (0, 0)),          # bias (f32)
                pl.BlockSpec((Bp, Hp), lambda i: (0, 0)),             # h0
                pl.BlockSpec((Bp, Hp), lambda i: (0, 0)),             # c0
            ],
            out_specs=pl.BlockSpec((Bp, Hp), lambda i: (0, 0)),
            scratch_shapes=[
                pltpu.VMEM((chunk, Bp, 4 * Hp), jnp.float32),  # per-chunk gates
                pltpu.VMEM((Bp, Hp), jnp.float32),             # h state (persists)
                pltpu.VMEM((Bp, Hp), jnp.float32),             # c state
            ],
            compiler_params=pltpu.CompilerParams(
                dimension_semantics=("arbitrary",),
                vmem_limit_bytes=32 * 1024 * 1024),
        )(x_tm, self.w_ih_p, self.w_hh_p, self.bias_p, h0, c0)

        # hn.view(-1, hidden_dim): with num_layers=1 this is just (B, H).
        return hn_p[:B, :H].reshape(-1, H)


if __name__ == "__main__":
    def ref_lstm(x, w_ih_t, w_hh_t, bias, H, h0=None, c0=None):
        Bq, Tq, _ = x.shape
        h = jnp.zeros((Bq, H), jnp.float32) if h0 is None else h0
        c = jnp.zeros((Bq, H), jnp.float32) if c0 is None else c0
        for t in range(Tq):
            g = x[:, t, :] @ w_ih_t + h @ w_hh_t + bias
            i = jax.nn.sigmoid(g[:, 0 * H:1 * H])
            f = jax.nn.sigmoid(g[:, 1 * H:2 * H])
            gg = jnp.tanh(g[:, 2 * H:3 * H])
            o = jax.nn.sigmoid(g[:, 3 * H:4 * H])
            c = f * c + i * gg
            h = o * jnp.tanh(c)
        return h

    key = jax.random.PRNGKey(0)
    k_param, k_x1, k_x2, k_h, k_c = jax.random.split(key, 5)

    # Test 1: B=2, T=8, D=4, H=32, zero initial state (module defaults).
    B, T, D, H = 2, 8, 4, 32
    enc = EncoderRNNPallas(input_dim=D, hidden_dim=H, num_layers=1, key=k_param)
    x1 = jax.random.normal(k_x1, (B, T, D), jnp.float32)
    hn1 = enc(x1)
    jax.block_until_ready(hn1)
    assert hn1.shape == (B, H), hn1.shape
    ref1 = ref_lstm(x1, enc.w_ih_t, enc.w_hh_t, enc.bias, H)
    err1 = float(jnp.max(jnp.abs(hn1 - ref1)))
    assert jnp.allclose(hn1, ref1, atol=2e-2, rtol=2e-2), err1   # bf16 MXU tolerance

    # Test 2: ragged T (multi-chunk + short epilogue) and an explicit hidden state.
    T2 = 13
    enc2 = EncoderRNNPallas(input_dim=D, hidden_dim=H, num_layers=1, key=k_param,
                            max_chunk=8)
    x2 = jax.random.normal(k_x2, (B, T2, D), jnp.float32)
    h0 = 0.1 * jax.random.normal(k_h, (1, B, H), jnp.float32)
    c0 = 0.1 * jax.random.normal(k_c, (1, B, H), jnp.float32)
    hn2 = enc2(x2, hidden_state=(h0, c0))
    jax.block_until_ready(hn2)
    assert hn2.shape == (B, H), hn2.shape
    ref2 = ref_lstm(x2, enc2.w_ih_t, enc2.w_hh_t, enc2.bias, H,
                    h0=h0.reshape(B, H), c0=c0.reshape(B, H))
    err2 = float(jnp.max(jnp.abs(hn2 - ref2)))
    assert jnp.allclose(hn2, ref2, atol=2e-2, rtol=2e-2), err2

    print("KERNEL_OK")
</pallas_src>

<mosaic_0001>
module attributes {stable_mosaic.version = 11 : i64} {
  func.func @_fused_lstm_kernel(%arg0: i32, %arg1: memref<8x16x4xbf16, #tpu.memory_space<vmem>>, %arg2: memref<4x512xbf16, #tpu.memory_space<vmem>>, %arg3: memref<128x512xbf16, #tpu.memory_space<vmem>>, %arg4: memref<1x512xf32, #tpu.memory_space<vmem>>, %arg5: memref<16x128xf32, #tpu.memory_space<vmem>>, %arg6: memref<16x128xf32, #tpu.memory_space<vmem>>, %arg7: memref<16x128xf32, #tpu.memory_space<vmem>>, %arg8: memref<8x16x512xf32, #tpu.memory_space<vmem>>, %arg9: memref<16x128xf32, #tpu.memory_space<vmem>>, %arg10: memref<16x128xf32, #tpu.memory_space<vmem>>) attributes {dimension_semantics = [#tpu.dimension_semantics<arbitrary>], iteration_bounds = array<i64: 1>, scalar_prefetch = 0 : i64, scratch_operands = 3 : i64, tpu.core_type = #tpu.core_type<tc>, window_params = [{transform_indices = @transform_0, window_bounds = array<i64: 8, 16, 4>}, {pipeline_mode = #tpu.pipeline_mode<synchronous>, transform_indices = @transform_1, window_bounds = array<i64: 4, 512>}, {pipeline_mode = #tpu.pipeline_mode<synchronous>, transform_indices = @transform_2, window_bounds = array<i64: 128, 512>}, {pipeline_mode = #tpu.pipeline_mode<synchronous>, transform_indices = @transform_3, window_bounds = array<i64: 1, 512>}, {pipeline_mode = #tpu.pipeline_mode<synchronous>, transform_indices = @transform_4, window_bounds = array<i64: 16, 128>}, {pipeline_mode = #tpu.pipeline_mode<synchronous>, transform_indices = @transform_5, window_bounds = array<i64: 16, 128>}, {pipeline_mode = #tpu.pipeline_mode<synchronous>, transform_indices = @transform_6, window_bounds = array<i64: 16, 128>}]} {
    %c0_i32 = arith.constant 0 : i32
    %0 = arith.cmpi eq, %arg0, %c0_i32 : i32
    %1 = arith.extui %0 : i1 to i32
    %c0_i32_0 = arith.constant 0 : i32
    %2 = arith.cmpi ne, %1, %c0_i32_0 : i32
    scf.if %2 {
      %c0_71 = arith.constant 0 : index
      %c0_72 = arith.constant 0 : index
      %260 = vector.load %arg5[%c0_71, %c0_72] : memref<16x128xf32, #tpu.memory_space<vmem>>, vector<16x128xf32>
      %c0_73 = arith.constant 0 : index
      %c0_74 = arith.constant 0 : index
      %261 = vector.load %arg9[%c0_73, %c0_74] : memref<16x128xf32, #tpu.memory_space<vmem>>, vector<16x128xf32>
      tpu.vector_store %arg9[%c0_73, %c0_74], %260 {strides = array<i32>} : memref<16x128xf32, #tpu.memory_space<vmem>>, vector<16x128xf32>,
      %c0_75 = arith.constant 0 : index
      %c0_76 = arith.constant 0 : index
      %262 = vector.load %arg6[%c0_75, %c0_76] : memref<16x128xf32, #tpu.memory_space<vmem>>, vector<16x128xf32>
      %c0_77 = arith.constant 0 : index
      %c0_78 = arith.constant 0 : index
      %263 = vector.load %arg10[%c0_77, %c0_78] : memref<16x128xf32, #tpu.memory_space<vmem>>, vector<16x128xf32>
      tpu.vector_store %arg10[%c0_77, %c0_78], %262 {strides = array<i32>} : memref<16x128xf32, #tpu.memory_space<vmem>>, vector<16x128xf32>,
    } else {
    }
    %c0 = arith.constant 0 : index
    %c0_1 = arith.constant 0 : index
    %c0_2 = arith.constant 0 : index
    %3 = vector.load %arg1[%c0, %c0_1, %c0_2] : memref<8x16x4xbf16, #tpu.memory_space<vmem>>, vector<8x16x4xbf16>
    %4 = vector.shape_cast %3 : vector<8x16x4xbf16> to vector<128x4xbf16>
    %c0_3 = arith.constant 0 : index
    %c0_4 = arith.constant 0 : index
    %5 = vector.load %arg2[%c0_3, %c0_4] : memref<4x512xbf16, #tpu.memory_space<vmem>>, vector<4x512xbf16>
    %cst = arith.constant dense<0.000000e+00> : vector<128x512xf32>
    %6 = tpu.matmul %4, %5, %cst {dimension_numbers = #tpu.dot_dimension_numbers<[1], [0], [0], [1], [0, 0, 1, 1], [], []>} : vector<128x4xbf16>, vector<4x512xbf16>, vector<128x512xf32> -> vector<128x512xf32>
    %c0_5 = arith.constant 0 : index
    %c0_6 = arith.constant 0 : index
    %7 = vector.load %arg4[%c0_5, %c0_6] : memref<1x512xf32, #tpu.memory_space<vmem>>, vector<1x512xf32>
    %8 = vector.broadcast %7 : vector<1x512xf32> to vector<128x512xf32>
    %9 = arith.addf %6, %8 : vector<128x512xf32>
    %10 = vector.shape_cast %9 : vector<128x512xf32> to vector<8x16x512xf32>
    %c0_7 = arith.constant 0 : index
    %c0_8 = arith.constant 0 : index
    %c0_9 = arith.constant 0 : index
    %11 = vector.load %arg8[%c0_7, %c0_8, %c0_9] : memref<8x16x512xf32, #tpu.memory_space<vmem>>, vector<8x16x512xf32>
    tpu.vector_store %arg8[%c0_7, %c0_8, %c0_9], %10 {strides = array<i32>} : memref<8x16x512xf32, #tpu.memory_space<vmem>>, vector<8x16x512xf32>,
    %c0_10 = arith.constant 0 : index
    %c0_11 = arith.constant 0 : index
    %12 = vector.load %arg3[%c0_10, %c0_11] : memref<128x512xbf16, #tpu.memory_space<vmem>>, vector<128x512xbf16>
    %c0_12 = arith.constant 0 : index
    %c0_13 = arith.constant 0 : index
    %13 = vector.load %arg9[%c0_12, %c0_13] : memref<16x128xf32, #tpu.memory_space<vmem>>, vector<16x128xf32>
    %c0_14 = arith.constant 0 : index
    %c0_15 = arith.constant 0 : index
    %14 = vector.load %arg10[%c0_14, %c0_15] : memref<16x128xf32, #tpu.memory_space<vmem>>, vector<16x128xf32>
    %c0_16 = arith.constant 0 : index
    %c0_17 = arith.constant 0 : index
    %c0_18 = arith.constant 0 : index
    %15 = vector.load %arg8[%c0_16, %c0_17, %c0_18] : memref<8x16x512xf32, #tpu.memory_space<vmem>>, vector<1x16x512xf32>
    %16 = vector.shape_cast %15 : vector<1x16x512xf32> to vector<16x512xf32>
    %17 = arith.truncf %13 : vector<16x128xf32> to vector<16x128xbf16>
    %cst_19 = arith.constant dense<0.000000e+00> : vector<16x512xf32>
    %18 = tpu.matmul %17, %12, %cst_19 {dimension_numbers = #tpu.dot_dimension_numbers<[1], [0], [0], [1], [0, 0, 1, 1], [], []>} : vector<16x128xbf16>, vector<128x512xbf16>, vector<16x512xf32> -> vector<16x512xf32>
    %19 = arith.addf %16, %18 : vector<16x512xf32>
    %20 = vector.extract_strided_slice %19 {offsets = [0, 0], sizes = [16, 128], strides = [1, 1]} : vector<16x512xf32> to vector<16x128xf32>
    %21 = arith.negf %20 : vector<16x128xf32>
    %22 = math.exp %21 : vector<16x128xf32>
    %cst_20 = arith.constant 1.000000e+00 : f32
    %23 = vector.broadcast %cst_20 : f32 to vector<16x128xf32>
    %24 = arith.addf %23, %22 : vector<16x128xf32>
    %25 = arith.divf %23, %24 : vector<16x128xf32>
    %26 = vector.extract_strided_slice %19 {offsets = [0, 128], sizes = [16, 128], strides = [1, 1]} : vector<16x512xf32> to vector<16x128xf32>
    %27 = arith.negf %26 : vector<16x128xf32>
    %28 = math.exp %27 : vector<16x128xf32>
    %cst_21 = arith.constant 1.000000e+00 : f32
    %29 = vector.broadcast %cst_21 : f32 to vector<16x128xf32>
    %30 = arith.addf %29, %28 : vector<16x128xf32>
    %31 = arith.divf %29, %30 : vector<16x128xf32>
    %32 = vector.extract_strided_slice %19 {offsets = [0, 256], sizes = [16, 128], strides = [1, 1]} : vector<16x512xf32> to vector<16x128xf32>
    %33 = math.tanh %32 : vector<16x128xf32>
    %34 = vector.extract_strided_slice %19 {offsets = [0, 384], sizes = [16, 128], strides = [1, 1]} : vector<16x512xf32> to vector<16x128xf32>
    %35 = arith.negf %34 : vector<16x128xf32>
    %36 = math.exp %35 : vector<16x128xf32>
    %cst_22 = arith.constant 1.000000e+00 : f32
    %37 = vector.broadcast %cst_22 : f32 to vector<16x128xf32>
    %38 = arith.addf %37, %36 : vector<16x128xf32>
    %39 = arith.divf %37, %38 : vector<16x128xf32>
    %40 = arith.mulf %31, %14 : vector<16x128xf32>
    %41 = arith.mulf %25, %33 : vector<16x128xf32>
    %42 = arith.addf %40, %41 : vector<16x128xf32>
    %43 = math.tanh %42 : vector<16x128xf32>
    %44 = arith.mulf %39, %43 : vector<16x128xf32>
    %c1 = arith.constant 1 : index
    %c0_23 = arith.constant 0 : index
    %c0_24 = arith.constant 0 : index
    %45 = vector.load %arg8[%c1, %c0_23, %c0_24] : memref<8x16x512xf32, #tpu.memory_space<vmem>>, vector<1x16x512xf32>
    %46 = vector.shape_cast %45 : vector<1x16x512xf32> to vector<16x512xf32>
    %47 = arith.truncf %44 : vector<16x128xf32> to vector<16x128xbf16>
    %cst_25 = arith.constant dense<0.000000e+00> : vector<16x512xf32>
    %48 = tpu.matmul %47, %12, %cst_25 {dimension_numbers = #tpu.dot_dimension_numbers<[1], [0], [0], [1], [0, 0, 1, 1], [], []>} : vector<16x128xbf16>, vector<128x512xbf16>, vector<16x512xf32> -> vector<16x512xf32>
    %49 = arith.addf %46, %48 : vector<16x512xf32>
    %50 = vector.extract_strided_slice %49 {offsets = [0, 0], sizes = [16, 128], strides = [1, 1]} : vector<16x512xf32> to vector<16x128xf32>
    %51 = arith.negf %50 : vector<16x128xf32>
    %52 = math.exp %51 : vector<16x128xf32>
    %cst_26 = arith.constant 1.000000e+00 : f32
    %53 = vector.broadcast %cst_26 : f32 to vector<16x128xf32>
    %54 = arith.addf %53, %52 : vector<16x128xf32>
    %55 = arith.divf %53, %54 : vector<16x128xf32>
    %56 = vector.extract_strided_slice %49 {offsets = [0, 128], sizes = [16, 128], strides = [1, 1]} : vector<16x512xf32> to vector<16x128xf32>
    %57 = arith.negf %56 : vector<16x128xf32>
    %58 = math.exp %57 : vector<16x128xf32>
    %cst_27 = arith.constant 1.000000e+00 : f32
    %59 = vector.broadcast %cst_27 : f32 to vector<16x128xf32>
    %60 = arith.addf %59, %58 : vector<16x128xf32>
    %61 = arith.divf %59, %60 : vector<16x128xf32>
    %62 = vector.extract_strided_slice %49 {offsets = [0, 256], sizes = [16, 128], strides = [1, 1]} : vector<16x512xf32> to vector<16x128xf32>
    %63 = math.tanh %62 : vector<16x128xf32>
    %64 = vector.extract_strided_slice %49 {offsets = [0, 384], sizes = [16, 128], strides = [1, 1]} : vector<16x512xf32> to vector<16x128xf32>
    %65 = arith.negf %64 : vector<16x128xf32>
    %66 = math.exp %65 : vector<16x128xf32>
    %cst_28 = arith.constant 1.000000e+00 : f32
    %67 = vector.broadcast %cst_28 : f32 to vector<16x128xf32>
    %68 = arith.addf %67, %66 : vector<16x128xf32>
    %69 = arith.divf %67, %68 : vector<16x128xf32>
    %70 = arith.mulf %61, %42 : vector<16x128xf32>
    %71 = arith.mulf %55, %63 : vector<16x128xf32>
    %72 = arith.addf %70, %71 : vector<16x128xf32>
    %73 = math.tanh %72 : vector<16x128xf32>
    %74 = arith.mulf %69, %73 : vector<16x128xf32>
    %c2 = arith.constant 2 : index
    %c0_29 = arith.constant 0 : index
    %c0_30 = arith.constant 0 : index
    %75 = vector.load %arg8[%c2, %c0_29, %c0_30] : memref<8x16x512xf32, #tpu.memory_space<vmem>>, vector<1x16x512xf32>
    %76 = vector.shape_cast %75 : vector<1x16x512xf32> to vector<16x512xf32>
    %77 = arith.truncf %74 : vector<16x128xf32> to vector<16x128xbf16>
    %cst_31 = arith.constant dense<0.000000e+00> : vector<16x512xf32>
    %78 = tpu.matmul %77, %12, %cst_31 {dimension_numbers = #tpu.dot_dimension_numbers<[1], [0], [0], [1], [0, 0, 1, 1], [], []>} : vector<16x128xbf16>, vector<128x512xbf16>, vector<16x512xf32> -> vector<16x512xf32>
    %79 = arith.addf %76, %78 : vector<16x512xf32>
    %80 = vector.extract_strided_slice %79 {offsets = [0, 0], sizes = [16, 128], strides = [1, 1]} : vector<16x512xf32> to vector<16x128xf32>
    %81 = arith.negf %80 : vector<16x128xf32>
    %82 = math.exp %81 : vector<16x128xf32>
    %cst_32 = arith.constant 1.000000e+00 : f32
    %83 = vector.broadcast %cst_32 : f32 to vector<16x128xf32>
    %84 = arith.addf %83, %82 : vector<16x128xf32>
    %85 = arith.divf %83, %84 : vector<16x128xf32>
    %86 = vector.extract_strided_slice %79 {offsets = [0, 128], sizes = [16, 128], strides = [1, 1]} : vector<16x512xf32> to vector<16x128xf32>
    %87 = arith.negf %86 : vector<16x128xf32>
    %88 = math.exp %87 : vector<16x128xf32>
    %cst_33 = arith.constant 1.000000e+00 : f32
    %89 = vector.broadcast %cst_33 : f32 to vector<16x128xf32>
    %90 = arith.addf %89, %88 : vector<16x128xf32>
    %91 = arith.divf %89, %90 : vector<16x128xf32>
    %92 = vector.extract_strided_slice %79 {offsets = [0, 256], sizes = [16, 128], strides = [1, 1]} : vector<16x512xf32> to vector<16x128xf32>
    %93 = math.tanh %92 : vector<16x128xf32>
    %94 = vector.extract_strided_slice %79 {offsets = [0, 384], sizes = [16, 128], strides = [1, 1]} : vector<16x512xf32> to vector<16x128xf32>
    %95 = arith.negf %94 : vector<16x128xf32>
    %96 = math.exp %95 : vector<16x128xf32>
    %cst_34 = arith.constant 1.000000e+00 : f32
    %97 = vector.broadcast %cst_34 : f32 to vector<16x128xf32>
    %98 = arith.addf %97, %96 : vector<16x128xf32>
    %99 = arith.divf %97, %98 : vector<16x128xf32>
    %100 = arith.mulf %91, %72 : vector<16x128xf32>
    %101 = arith.mulf %85, %93 : vector<16x128xf32>
    %102 = arith.addf %100, %101 : vector<16x128xf32>
    %103 = math.tanh %102 : vector<16x128xf32>
    %104 = arith.mulf %99, %103 : vector<16x128xf32>
    %c3 = arith.constant 3 : index
    %c0_35 = arith.constant 0 : index
    %c0_36 = arith.constant 0 : index
    %105 = vector.load %arg8[%c3, %c0_35, %c0_36] : memref<8x16x512xf32, #tpu.memory_space<vmem>>, vector<1x16x512xf32>
    %106 = vector.shape_cast %105 : vector<1x16x512xf32> to vector<16x512xf32>
    %107 = arith.truncf %104 : vector<16x128xf32> to vector<16x128xbf16>
    %cst_37 = arith.constant dense<0.000000e+00> : vector<16x512xf32>
    %108 = tpu.matmul %107, %12, %cst_37 {dimension_numbers = #tpu.dot_dimension_numbers<[1], [0], [0], [1], [0, 0, 1, 1], [], []>} : vector<16x128xbf16>, vector<128x512xbf16>, vector<16x512xf32> -> vector<16x512xf32>
    %109 = arith.addf %106, %108 : vector<16x512xf32>
    %110 = vector.extract_strided_slice %109 {offsets = [0, 0], sizes = [16, 128], strides = [1, 1]} : vector<16x512xf32> to vector<16x128xf32>
    %111 = arith.negf %110 : vector<16x128xf32>
    %112 = math.exp %111 : vector<16x128xf32>
    %cst_38 = arith.constant 1.000000e+00 : f32
    %113 = vector.broadcast %cst_38 : f32 to vector<16x128xf32>
    %114 = arith.addf %113, %112 : vector<16x128xf32>
    %115 = arith.divf %113, %114 : vector<16x128xf32>
    %116 = vector.extract_strided_slice %109 {offsets = [0, 128], sizes = [16, 128], strides = [1, 1]} : vector<16x512xf32> to vector<16x128xf32>
    %117 = arith.negf %116 : vector<16x128xf32>
    %118 = math.exp %117 : vector<16x128xf32>
    %cst_39 = arith.constant 1.000000e+00 : f32
    %119 = vector.broadcast %cst_39 : f32 to vector<16x128xf32>
    %120 = arith.addf %119, %118 : vector<16x128xf32>
    %121 = arith.divf %119, %120 : vector<16x128xf32>
    %122 = vector.extract_strided_slice %109 {offsets = [0, 256], sizes = [16, 128], strides = [1, 1]} : vector<16x512xf32> to vector<16x128xf32>
    %123 = math.tanh %122 : vector<16x128xf32>
    %124 = vector.extract_strided_slice %109 {offsets = [0, 384], sizes = [16, 128], strides = [1, 1]} : vector<16x512xf32> to vector<16x128xf32>
    %125 = arith.negf %124 : vector<16x128xf32>
    %126 = math.exp %125 : vector<16x128xf32>
    %cst_40 = arith.constant 1.000000e+00 : f32
    %127 = vector.broadcast %cst_40 : f32 to vector<16x128xf32>
    %128 = arith.addf %127, %126 : vector<16x128xf32>
    %129 = arith.divf %127, %128 : vector<16x128xf32>
    %130 = arith.mulf %121, %102 : vector<16x128xf32>
    %131 = arith.mulf %115, %123 : vector<16x128xf32>
    %132 = arith.addf %130, %131 : vector<16x128xf32>
    %133 = math.tanh %132 : vector<16x128xf32>
    %134 = arith.mulf %129, %133 : vector<16x128xf32>
    %c4 = arith.constant 4 : index
    %c0_41 = arith.constant 0 : index
    %c0_42 = arith.constant 0 : index
    %135 = vector.load %arg8[%c4, %c0_41, %c0_42] : memref<8x16x512xf32, #tpu.memory_space<vmem>>, vector<1x16x512xf32>
    %136 = vector.shape_cast %135 : vector<1x16x512xf32> to vector<16x512xf32>
    %137 = arith.truncf %134 : vector<16x128xf32> to vector<16x128xbf16>
    %cst_43 = arith.constant dense<0.000000e+00> : vector<16x512xf32>
    %138 = tpu.matmul %137, %12, %cst_43 {dimension_numbers = #tpu.dot_dimension_numbers<[1], [0], [0], [1], [0, 0, 1, 1], [], []>} : vector<16x128xbf16>, vector<128x512xbf16>, vector<16x512xf32> -> vector<16x512xf32>
    %139 = arith.addf %136, %138 : vector<16x512xf32>
    %140 = vector.extract_strided_slice %139 {offsets = [0, 0], sizes = [16, 128], strides = [1, 1]} : vector<16x512xf32> to vector<16x128xf32>
    %141 = arith.negf %140 : vector<16x128xf32>
    %142 = math.exp %141 : vector<16x128xf32>
    %cst_44 = arith.constant 1.000000e+00 : f32
    %143 = vector.broadcast %cst_44 : f32 to vector<16x128xf32>
    %144 = arith.addf %143, %142 : vector<16x128xf32>
    %145 = arith.divf %143, %144 : vector<16x128xf32>
    %146 = vector.extract_strided_slice %139 {offsets = [0, 128], sizes = [16, 128], strides = [1, 1]} : vector<16x512xf32> to vector<16x128xf32>
    %147 = arith.negf %146 : vector<16x128xf32>
    %148 = math.exp %147 : vector<16x128xf32>
    %cst_45 = arith.constant 1.000000e+00 : f32
    %149 = vector.broadcast %cst_45 : f32 to vector<16x128xf32>
    %150 = arith.addf %149, %148 : vector<16x128xf32>
    %151 = arith.divf %149, %150 : vector<16x128xf32>
    %152 = vector.extract_strided_slice %139 {offsets = [0, 256], sizes = [16, 128], strides = [1, 1]} : vector<16x512xf32> to vector<16x128xf32>
    %153 = math.tanh %152 : vector<16x128xf32>
    %154 = vector.extract_strided_slice %139 {offsets = [0, 384], sizes = [16, 128], strides = [1, 1]} : vector<16x512xf32> to vector<16x128xf32>
    %155 = arith.negf %154 : vector<16x128xf32>
    %156 = math.exp %155 : vector<16x128xf32>
    %cst_46 = arith.constant 1.000000e+00 : f32
    %157 = vector.broadcast %cst_46 : f32 to vector<16x128xf32>
    %158 = arith.addf %157, %156 : vector<16x128xf32>
    %159 = arith.divf %157, %158 : vector<16x128xf32>
    %160 = arith.mulf %151, %132 : vector<16x128xf32>
    %161 = arith.mulf %145, %153 : vector<16x128xf32>
    %162 = arith.addf %160, %161 : vector<16x128xf32>
    %163 = math.tanh %162 : vector<16x128xf32>
    %164 = arith.mulf %159, %163 : vector<16x128xf32>
    %c5 = arith.constant 5 : index
    %c0_47 = arith.constant 0 : index
    %c0_48 = arith.constant 0 : index
    %165 = vector.load %arg8[%c5, %c0_47, %c0_48] : memref<8x16x512xf32, #tpu.memory_space<vmem>>, vector<1x16x512xf32>
    %166 = vector.shape_cast %165 : vector<1x16x512xf32> to vector<16x512xf32>
    %167 = arith.truncf %164 : vector<16x128xf32> to vector<16x128xbf16>
    %cst_49 = arith.constant dense<0.000000e+00> : vector<16x512xf32>
    %168 = tpu.matmul %167, %12, %cst_49 {dimension_numbers = #tpu.dot_dimension_numbers<[1], [0], [0], [1], [0, 0, 1, 1], [], []>} : vector<16x128xbf16>, vector<128x512xbf16>, vector<16x512xf32> -> vector<16x512xf32>
    %169 = arith.addf %166, %168 : vector<16x512xf32>
    %170 = vector.extract_strided_slice %169 {offsets = [0, 0], sizes = [16, 128], strides = [1, 1]} : vector<16x512xf32> to vector<16x128xf32>
    %171 = arith.negf %170 : vector<16x128xf32>
    %172 = math.exp %171 : vector<16x128xf32>
    %cst_50 = arith.constant 1.000000e+00 : f32
    %173 = vector.broadcast %cst_50 : f32 to vector<16x128xf32>
    %174 = arith.addf %173, %172 : vector<16x128xf32>
    %175 = arith.divf %173, %174 : vector<16x128xf32>
    %176 = vector.extract_strided_slice %169 {offsets = [0, 128], sizes = [16, 128], strides = [1, 1]} : vector<16x512xf32> to vector<16x128xf32>
    %177 = arith.negf %176 : vector<16x128xf32>
    %178 = math.exp %177 : vector<16x128xf32>
    %cst_51 = arith.constant 1.000000e+00 : f32
    %179 = vector.broadcast %cst_51 : f32 to vector<16x128xf32>
    %180 = arith.addf %179, %178 : vector<16x128xf32>
    %181 = arith.divf %179, %180 : vector<16x128xf32>
    %182 = vector.extract_strided_slice %169 {offsets = [0, 256], sizes = [16, 128], strides = [1, 1]} : vector<16x512xf32> to vector<16x128xf32>
    %183 = math.tanh %182 : vector<16x128xf32>
    %184 = vector.extract_strided_slice %169 {offsets = [0, 384], sizes = [16, 128], strides = [1, 1]} : vector<16x512xf32> to vector<16x128xf32>
    %185 = arith.negf %184 : vector<16x128xf32>
    %186 = math.exp %185 : vector<16x128xf32>
    %cst_52 = arith.constant 1.000000e+00 : f32
    %187 = vector.broadcast %cst_52 : f32 to vector<16x128xf32>
    %188 = arith.addf %187, %186 : vector<16x128xf32>
    %189 = arith.divf %187, %188 : vector<16x128xf32>
    %190 = arith.mulf %181, %162 : vector<16x128xf32>
    %191 = arith.mulf %175, %183 : vector<16x128xf32>
    %192 = arith.addf %190, %191 : vector<16x128xf32>
    %193 = math.tanh %192 : vector<16x128xf32>
    %194 = arith.mulf %189, %193 : vector<16x128xf32>
    %c6 = arith.constant 6 : index
    %c0_53 = arith.constant 0 : index
    %c0_54 = arith.constant 0 : index
    %195 = vector.load %arg8[%c6, %c0_53, %c0_54] : memref<8x16x512xf32, #tpu.memory_space<vmem>>, vector<1x16x512xf32>
    %196 = vector.shape_cast %195 : vector<1x16x512xf32> to vector<16x512xf32>
    %197 = arith.truncf %194 : vector<16x128xf32> to vector<16x128xbf16>
    %cst_55 = arith.constant dense<0.000000e+00> : vector<16x512xf32>
    %198 = tpu.matmul %197, %12, %cst_55 {dimension_numbers = #tpu.dot_dimension_numbers<[1], [0], [0], [1], [0, 0, 1, 1], [], []>} : vector<16x128xbf16>, vector<128x512xbf16>, vector<16x512xf32> -> vector<16x512xf32>
    %199 = arith.addf %196, %198 : vector<16x512xf32>
    %200 = vector.extract_strided_slice %199 {offsets = [0, 0], sizes = [16, 128], strides = [1, 1]} : vector<16x512xf32> to vector<16x128xf32>
    %201 = arith.negf %200 : vector<16x128xf32>
    %202 = math.exp %201 : vector<16x128xf32>
    %cst_56 = arith.constant 1.000000e+00 : f32
    %203 = vector.broadcast %cst_56 : f32 to vector<16x128xf32>
    %204 = arith.addf %203, %202 : vector<16x128xf32>
    %205 = arith.divf %203, %204 : vector<16x128xf32>
    %206 = vector.extract_strided_slice %199 {offsets = [0, 128], sizes = [16, 128], strides = [1, 1]} : vector<16x512xf32> to vector<16x128xf32>
    %207 = arith.negf %206 : vector<16x128xf32>
    %208 = math.exp %207 : vector<16x128xf32>
    %cst_57 = arith.constant 1.000000e+00 : f32
    %209 = vector.broadcast %cst_57 : f32 to vector<16x128xf32>
    %210 = arith.addf %209, %208 : vector<16x128xf32>
    %211 = arith.divf %209, %210 : vector<16x128xf32>
    %212 = vector.extract_strided_slice %199 {offsets = [0, 256], sizes = [16, 128], strides = [1, 1]} : vector<16x512xf32> to vector<16x128xf32>
    %213 = math.tanh %212 : vector<16x128xf32>
    %214 = vector.extract_strided_slice %199 {offsets = [0, 384], sizes = [16, 128], strides = [1, 1]} : vector<16x512xf32> to vector<16x128xf32>
    %215 = arith.negf %214 : vector<16x128xf32>
    %216 = math.exp %215 : vector<16x128xf32>
    %cst_58 = arith.constant 1.000000e+00 : f32
    %217 = vector.broadcast %cst_58 : f32 to vector<16x128xf32>
    %218 = arith.addf %217, %216 : vector<16x128xf32>
    %219 = arith.divf %217, %218 : vector<16x128xf32>
    %220 = arith.mulf %211, %192 : vector<16x128xf32>
    %221 = arith.mulf %205, %213 : vector<16x128xf32>
    %222 = arith.addf %220, %221 : vector<16x128xf32>
    %223 = math.tanh %222 : vector<16x128xf32>
    %224 = arith.mulf %219, %223 : vector<16x128xf32>
    %c7 = arith.constant 7 : index
    %c0_59 = arith.constant 0 : index
    %c0_60 = arith.constant 0 : index
    %225 = vector.load %arg8[%c7, %c0_59, %c0_60] : memref<8x16x512xf32, #tpu.memory_space<vmem>>, vector<1x16x512xf32>
    %226 = vector.shape_cast %225 : vector<1x16x512xf32> to vector<16x512xf32>
    %227 = arith.truncf %224 : vector<16x128xf32> to vector<16x128xbf16>
    %cst_61 = arith.constant dense<0.000000e+00> : vector<16x512xf32>
    %228 = tpu.matmul %227, %12, %cst_61 {dimension_numbers = #tpu.dot_dimension_numbers<[1], [0], [0], [1], [0, 0, 1, 1], [], []>} : vector<16x128xbf16>, vector<128x512xbf16>, vector<16x512xf32> -> vector<16x512xf32>
    %229 = arith.addf %226, %228 : vector<16x512xf32>
    %230 = vector.extract_strided_slice %229 {offsets = [0, 0], sizes = [16, 128], strides = [1, 1]} : vector<16x512xf32> to vector<16x128xf32>
    %231 = arith.negf %230 : vector<16x128xf32>
    %232 = math.exp %231 : vector<16x128xf32>
    %cst_62 = arith.constant 1.000000e+00 : f32
    %233 = vector.broadcast %cst_62 : f32 to vector<16x128xf32>
    %234 = arith.addf %233, %232 : vector<16x128xf32>
    %235 = arith.divf %233, %234 : vector<16x128xf32>
    %236 = vector.extract_strided_slice %229 {offsets = [0, 128], sizes = [16, 128], strides = [1, 1]} : vector<16x512xf32> to vector<16x128xf32>
    %237 = arith.negf %236 : vector<16x128xf32>
    %238 = math.exp %237 : vector<16x128xf32>
    %cst_63 = arith.constant 1.000000e+00 : f32
    %239 = vector.broadcast %cst_63 : f32 to vector<16x128xf32>
    %240 = arith.addf %239, %238 : vector<16x128xf32>
    %241 = arith.divf %239, %240 : vector<16x128xf32>
    %242 = vector.extract_strided_slice %229 {offsets = [0, 256], sizes = [16, 128], strides = [1, 1]} : vector<16x512xf32> to vector<16x128xf32>
    %243 = math.tanh %242 : vector<16x128xf32>
    %244 = vector.extract_strided_slice %229 {offsets = [0, 384], sizes = [16, 128], strides = [1, 1]} : vector<16x512xf32> to vector<16x128xf32>
    %245 = arith.negf %244 : vector<16x128xf32>
    %246 = math.exp %245 : vector<16x128xf32>
    %cst_64 = arith.constant 1.000000e+00 : f32
    %247 = vector.broadcast %cst_64 : f32 to vector<16x128xf32>
    %248 = arith.addf %247, %246 : vector<16x128xf32>
    %249 = arith.divf %247, %248 : vector<16x128xf32>
    %250 = arith.mulf %241, %222 : vector<16x128xf32>
    %251 = arith.mulf %235, %243 : vector<16x128xf32>
    %252 = arith.addf %250, %251 : vector<16x128xf32>
    %253 = math.tanh %252 : vector<16x128xf32>
    %254 = arith.mulf %249, %253 : vector<16x128xf32>
    %c0_65 = arith.constant 0 : index
    %c0_66 = arith.constant 0 : index
    %255 = vector.load %arg9[%c0_65, %c0_66] : memref<16x128xf32, #tpu.memory_space<vmem>>, vector<16x128xf32>
    tpu.vector_store %arg9[%c0_65, %c0_66], %254 {strides = array<i32>} : memref<16x128xf32, #tpu.memory_space<vmem>>, vector<16x128xf32>,
    %c0_67 = arith.constant 0 : index
    %c0_68 = arith.constant 0 : index
    %256 = vector.load %arg10[%c0_67, %c0_68] : memref<16x128xf32, #tpu.memory_space<vmem>>, vector<16x128xf32>
    tpu.vector_store %arg10[%c0_67, %c0_68], %252 {strides = array<i32>} : memref<16x128xf32, #tpu.memory_space<vmem>>, vector<16x128xf32>,
    %c0_i32_69 = arith.constant 0 : i32
    %257 = arith.cmpi eq, %arg0, %c0_i32_69 : i32
    %258 = arith.extui %257 : i1 to i32
    %c0_i32_70 = arith.constant 0 : i32
    %259 = arith.cmpi ne, %258, %c0_i32_70 : i32
    scf.if %259 {
      %c0_71 = arith.constant 0 : index
      %c0_72 = arith.constant 0 : index
      %260 = vector.load %arg9[%c0_71, %c0_72] : memref<16x128xf32, #tpu.memory_space<vmem>>, vector<16x128xf32>
      %c0_73 = arith.constant 0 : index
      %c0_74 = arith.constant 0 : index
      %261 = vector.load %arg7[%c0_73, %c0_74] : memref<16x128xf32, #tpu.memory_space<vmem>>, vector<16x128xf32>
      tpu.vector_store %arg7[%c0_73, %c0_74], %260 {strides = array<i32>} : memref<16x128xf32, #tpu.memory_space<vmem>>, vector<16x128xf32>,
    } else {
    }
    return
  }
  func.func @transform_0(%arg0: i32) -> (i32, i32, i32) {
    %c0_i32 = arith.constant 0 : i32
    %c0_i32_0 = arith.constant 0 : i32
    %c0_i32_1 = arith.constant 0 : i32
    return %arg0, %c0_i32, %c0_i32_0 : i32, i32, i32
  }
  func.func @transform_1(%arg0: i32) -> (i32, i32) {
    %c0_i32 = arith.constant 0 : i32
    %c0_i32_0 = arith.constant 0 : i32
    %c0_i32_1 = arith.constant 0 : i32
    return %c0_i32, %c0_i32_0 : i32, i32
  }
  func.func @transform_2(%arg0: i32) -> (i32, i32) {
    %c0_i32 = arith.constant 0 : i32
    %c0_i32_0 = arith.constant 0 : i32
    %c0_i32_1 = arith.constant 0 : i32
    return %c0_i32, %c0_i32_0 : i32, i32
  }
  func.func @transform_3(%arg0: i32) -> (i32, i32) {
    %c0_i32 = arith.constant 0 : i32
    %c0_i32_0 = arith.constant 0 : i32
    %c0_i32_1 = arith.constant 0 : i32
    return %c0_i32, %c0_i32_0 : i32, i32
  }
  func.func @transform_4(%arg0: i32) -> (i32, i32) {
    %c0_i32 = arith.constant 0 : i32
    %c0_i32_0 = arith.constant 0 : i32
    %c0_i32_1 = arith.constant 0 : i32
    return %c0_i32, %c0_i32_0 : i32, i32
  }
  func.func @transform_5(%arg0: i32) -> (i32, i32) {
    %c0_i32 = arith.constant 0 : i32
    %c0_i32_0 = arith.constant 0 : i32
    %c0_i32_1 = arith.constant 0 : i32
    return %c0_i32, %c0_i32_0 : i32, i32
  }
  func.func @transform_6(%arg0: i32) -> (i32, i32) {
    %c0_i32 = arith.constant 0 : i32
    %c0_i32_0 = arith.constant 0 : i32
    %c0_i32_1 = arith.constant 0 : i32
    return %c0_i32, %c0_i32_0 : i32, i32
  }
}

</mosaic_0001>

<llo_original>
// kernel: tpu_custom_call.1
$region0: #{tpu_custom_call.1}
  #allocation0 [shape = 'u32[]', space=smem, size = 0x4, offset = 0x4, fixed_abs, tag = 'smem constant byte address 0x4 - core index']
  #allocation1 [shape = 'u32[72,128]{1,0:T(1,128)}', space=vmem, size = 0x9000, scoped, tag = 'internal scratch']
  #allocation2 [shape = 'f32[8,16,512]{2,1,0:T(8,128)}', space=vmem, size = 0x40000, scoped, tag = 'scratch operand']
  #allocation3 [shape = 'f32[16,128]{1,0:T(8,128)}', space=vmem, size = 0x2000, scoped, tag = 'scratch operand']
  #allocation4 [shape = 'f32[16,128]{1,0:T(8,128)}', space=vmem, size = 0x2000, scoped, tag = 'scratch operand']
  %s0 = inlined_call_operand.vmem [shape: bf16[8,16,4], index: 0, kind: input, shape index: {}]
  %s1 = inlined_call_operand.vmem [shape: bf16[4,512], index: 1, kind: input, shape index: {}]
  %s2 = inlined_call_operand.hbm [shape: bf16[128,512], index: 2, kind: input, shape index: {}]
  %s3 = inlined_call_operand.vmem [shape: f32[1,512], index: 3, kind: input, shape index: {}]
  %s4 = inlined_call_operand.vmem [shape: f32[16,128], index: 4, kind: input, shape index: {}]
  %s5 = inlined_call_operand.vmem [shape: f32[16,128], index: 5, kind: input, shape index: {}]
  %s6 = inlined_call_operand.hbm [shape: f32[16,128], index: 6, kind: output, shape index: {}]
  %s7 = sld [smem:[#allocation0]]
  $region46: #{tpu_custom_call.1} parent=0
    _
  %s9 = ssub.s32 1, %s7
  %s10 = scalar_select 0, %s9, %s7
  $region1: #{tpu_custom_call.1} parent=0
    #allocation5 [shape = 'u8[131072]{0}', space=vmem, size = 0x20000, scoped, tag = 'input window, operand 2, single buffered']
    #allocation6 [shape = 's32[1]{0}', space=sflag, size = 0x4, scoped, tag = 'scoped memory for tpu_custom_call.1']
    #allocation7 [shape = 's32[1]{0}', space=sflag, size = 0x4, scoped, tag = 'scoped memory for tpu_custom_call.1']
    #allocation8 [shape = 'u8[8192]{0}', space=vmem, size = 0x2000, scoped, tag = 'output window, operand 0, single buffered']
    %11 = vsyncpa [#allocation6], 0
    %12 = vsyncpa [#allocation7], 0
    // Predicated region
    $region2: #{tpu_custom_call.1} parent=1 // pred_check
      _
    $region3: #{tpu_custom_call.1} parent=1 // pred_check_branch
      %14 = sbr.rel (0) target = $region5
    $region4: #{tpu_custom_call.1} parent=1 // pred_region
      _
    $region5: #{tpu_custom_call.1} parent=1 // pred_fallthru
      _
    // Predicated region
    $region6: #{tpu_custom_call.1} parent=1 // pred_check
      _
    $region7: #{tpu_custom_call.1} parent=1 // pred_check_branch
      %16 = sbr.rel (0) target = $region9
    $region8: #{tpu_custom_call.1} parent=1 // pred_region
      _
    $region9: #{tpu_custom_call.1} parent=1 // pred_fallthru
      _
    // Predicated region
    $region10: #{tpu_custom_call.1} parent=1 // pred_check
      _
    $region11: #{tpu_custom_call.1} parent=1 // pred_check_branch
      %18 = sbr.rel (0) target = $region13
    $region12: #{tpu_custom_call.1} parent=1 // pred_region
      %20 = vsyncadd [#allocation6], 0
      %s21 = sshll.u32 %s2, 4
      %s22 = int_to_ptr.hbm [resolvable:$true] %s21
      %s23 = sshll.u32 [#allocation5], 4
      %s24 = int_to_ptr.vmem [resolvable:$true] %s23
      %29 = dma.hbm_to_vmem [thread:$0]  %s22, 4096, %s24, [#allocation6], 256, 256, 16
    $region13: #{tpu_custom_call.1} parent=1 // pred_fallthru
      _
    // Predicated region
    $region14: #{tpu_custom_call.1} parent=1 // pred_check
      _
    $region15: #{tpu_custom_call.1} parent=1 // pred_check_branch
      %31 = sbr.rel (0) target = $region17
    $region16: #{tpu_custom_call.1} parent=1 // pred_region
      _
    $region17: #{tpu_custom_call.1} parent=1 // pred_fallthru
      _
    // Predicated region
    $region18: #{tpu_custom_call.1} parent=1 // pred_check
      _
    $region19: #{tpu_custom_call.1} parent=1 // pred_check_branch
      %33 = sbr.rel (0) target = $region21
    $region20: #{tpu_custom_call.1} parent=1 // pred_region
      _
    $region21: #{tpu_custom_call.1} parent=1 // pred_fallthru
      _
    // Predicated region
    $region22: #{tpu_custom_call.1} parent=1 // pred_check
      _
    $region23: #{tpu_custom_call.1} parent=1 // pred_check_branch
      %35 = sbr.rel (0) target = $region25
    $region24: #{tpu_custom_call.1} parent=1 // pred_region
      _
    $region25: #{tpu_custom_call.1} parent=1 // pred_fallthru
      _
    // Predicated region
    $region26: #{tpu_custom_call.1} parent=1 // pred_check
      _
    $region27: #{tpu_custom_call.1} parent=1 // pred_check_branch
      %37 = sbr.rel (0) target = $region29
    $region28: #{tpu_custom_call.1} parent=1 // pred_region
      %39 = dma.done [#allocation6], 4096
    $region29: #{tpu_custom_call.1} parent=1 // pred_fallthru
      _
    %p41 = scmp.eq.s32.totalorder 0, 0
    // Predicated region
    $region30: #{tpu_custom_call.1} parent=1 // pred_check
      %p42 = pneg %p41
    $region31: #{tpu_custom_call.1} parent=1 // pred_check_branch
      %44 = sbr.rel (%p42) target = $region33
    $region32: #{tpu_custom_call.1} parent=1 // pred_region
      %v45 = vld [vmem:[%s4] sm:$0xff]
      %v46 = vld [vmem:[%s4 + $0x8] sm:$0xff]
      %47 = vst [vmem:[#allocation3] sm:$0xff] %v45
      %48 = vst [vmem:[#allocation3 + $0x8] sm:$0xff] %v46
      %v49 = vld [vmem:[%s5] sm:$0xff]
      %v50 = vld [vmem:[%s5 + $0x8] sm:$0xff]
      %51 = vst [vmem:[#allocation4] sm:$0xff] %v49
      %52 = vst [vmem:[#allocation4 + $0x8] sm:$0xff] %v50
    $region33: #{tpu_custom_call.1} parent=1 // pred_fallthru
      _
    %v53 = vld [vmem:[%s0] sm:$0xf]
    %v54 = vld [vmem:[%s0 + $0x4] sm:$0xf]
    %v55 = vld [vmem:[%s0 + $0x8] sm:$0xf]
    %v56 = vld [vmem:[%s0 + $0xc] sm:$0xf]
    %v57 = vld [vmem:[%s0 + $0x10] sm:$0xf]
    %v58 = vld [vmem:[%s0 + $0x14] sm:$0xf]
    %v59 = vld [vmem:[%s0 + $0x18] sm:$0xf]
    %v60 = vld [vmem:[%s0 + $0x1c] sm:$0xf]
    %v61 = vld [vmem:[%s0 + $0x20] sm:$0xf]
    %v62 = vld [vmem:[%s0 + $0x24] sm:$0xf]
    %v63 = vld [vmem:[%s0 + $0x28] sm:$0xf]
    %v64 = vld [vmem:[%s0 + $0x2c] sm:$0xf]
    %v65 = vld [vmem:[%s0 + $0x30] sm:$0xf]
    %v66 = vld [vmem:[%s0 + $0x34] sm:$0xf]
    %v67 = vld [vmem:[%s0 + $0x38] sm:$0xf]
    %v68 = vld [vmem:[%s0 + $0x3c] sm:$0xf]
    %v69 = vld [vmem:[%s1] sm:$0xff]
    %v70 = vld [vmem:[%s3] sm:$0xf]
    %v72 = vperm.slane %v70, 0
    %v73 = vperm.slane %v70, 1
    %v74 = vperm.slane %v70, 2
    %v75 = vperm.slane %v70, 3
    %v96 = vunpack.c.l.b16 %v53
    %v97 = vunpack.c.l.b16 %v54
    %v98 = vunpack.c.l.b16 %v55
    %v99 = vunpack.c.l.b16 %v56
    %v100 = vunpack.c.l.b16 %v57
    %v101 = vunpack.c.l.b16 %v58
    %v102 = vunpack.c.l.b16 %v59
    %v103 = vunpack.c.l.b16 %v60
    %v104 = vunpack.c.l.b16 %v61
    %v105 = vunpack.c.l.b16 %v62
    %v106 = vunpack.c.l.b16 %v63
    %v107 = vunpack.c.l.b16 %v64
    %v108 = vunpack.c.l.b16 %v65
    %v109 = vunpack.c.l.b16 %v66
    %v110 = vunpack.c.l.b16 %v67
    %v111 = vunpack.c.l.b16 %v68
    %v112 = vpack.c.b16 %v97, %v96
    %v113 = vpack.c.b16 %v99, %v98
    %v114 = vpack.c.b16 %v101, %v100
    %v115 = vpack.c.b16 %v103, %v102
    %v116 = vpack.c.b16 %v105, %v104
    %v117 = vpack.c.b16 %v107, %v106
    %v118 = vpack.c.b16 %v109, %v108
    %v119 = vpack.c.b16 %v111, %v110
    %121 = vst [vmem:[#allocation1] ss:$4 sm:$0xff] %v69
    %v122 = vld.sshfl [vmem:[#allocation1] sm:$0xff pattern:$0x73625140]
    %v123 = vld.sshfl [vmem:[#allocation1 + $0x8] sm:$0xff pattern:$0x73625140]
    %v124 = vld.sshfl [vmem:[#allocation1 + $0x10] sm:$0xff pattern:$0x73625140]
    %v125 = vld.sshfl [vmem:[#allocation1 + $0x18] sm:$0xff pattern:$0x73625140]
    %vm126 = vcmask 31744
    %v128 = vsel %vm126, %v112, 0
    %v131 = vsel %vm126, %v113, 0
    %v134 = vsel %vm126, %v114, 0
    %v137 = vsel %vm126, %v115, 0
    %v140 = vsel %vm126, %v116, 0
    %v143 = vsel %vm126, %v117, 0
    %v146 = vsel %vm126, %v118, 0
    %v149 = vsel %vm126, %v119, 0
    %vm151 = vcmask 1041408
    %v152 = vsel %vm151, %v122, 0
    %v154 = vsel %vm151, %v123, 0
    %v156 = vsel %vm151, %v124, 0
    %v158 = vsel %vm151, %v125, 0
    %160 = vmatpush.bf16.msra.mxu0 0
    %161 = vmatpush.bf16.msra.mxu0 0
    %162 = vmatpush.bf16.msra.mxu0 0
    %163 = vmatpush.bf16.msra.mxu0 0
    %164 = vmatpush.bf16.msra.mxu0 0
    %165 = vmatpush.bf16.msra.mxu0 0
    %166 = vmatpush.bf16.msra.mxu0 0
    %167 = vmatpush.bf16.msra.mxu0 %v152
    %168 = vmatmul.bf16.gmra.mxu0 %v128
    %v169 = vpop.f32.mrf.mxu0
    %v170 = vadd.f32 %v72, %v169
    %v171 = vpop.f32.mrf.mxu0
    %v172 = vadd.f32 %v72, %v171
    %173 = vmatmul.bf16.gmra.mxu0 %v131
    %v174 = vpop.f32.mrf.mxu0
    %v175 = vadd.f32 %v72, %v174
    %v176 = vpop.f32.mrf.mxu0
    %v177 = vadd.f32 %v72, %v176
    %178 = vmatmul.bf16.gmra.mxu0 %v134
    %v179 = vpop.f32.mrf.mxu0
    %v180 = vadd.f32 %v72, %v179
    %v181 = vpop.f32.mrf.mxu0
    %v182 = vadd.f32 %v72, %v181
    %183 = vmatmul.bf16.gmra.mxu0 %v137
    %v184 = vpop.f32.mrf.mxu0
    %v185 = vadd.f32 %v72, %v184
    %v186 = vpop.f32.mrf.mxu0
    %v187 = vadd.f32 %v72, %v186
    %188 = vmatmul.bf16.gmra.mxu0 %v140
    %v189 = vpop.f32.mrf.mxu0
    %v190 = vadd.f32 %v72, %v189
    %v191 = vpop.f32.mrf.mxu0
    %v192 = vadd.f32 %v72, %v191
    %193 = vmatmul.bf16.gmra.mxu0 %v143
    %v194 = vpop.f32.mrf.mxu0
    %v195 = vadd.f32 %v72, %v194
    %v196 = vpop.f32.mrf.mxu0
    %v197 = vadd.f32 %v72, %v196
    %198 = vmatmul.bf16.gmra.mxu0 %v146
    %v199 = vpop.f32.mrf.mxu0
    %v200 = vadd.f32 %v72, %v199
    %v201 = vpop.f32.mrf.mxu0
    %v202 = vadd.f32 %v72, %v201
    %203 = vmatmul.bf16.gmra.mxu0 %v149
    %v204 = vpop.f32.mrf.mxu0
    %v205 = vadd.f32 %v72, %v204
    %v206 = vpop.f32.mrf.mxu0
    %v207 = vadd.f32 %v72, %v206
    %208 = vdwg.mxu0
    %209 = vmatpush.bf16.msra.mxu0 0
    %210 = vmatpush.bf16.msra.mxu0 0
    %211 = vmatpush.bf16.msra.mxu0 0
    %212 = vmatpush.bf16.msra.mxu0 0
    %213 = vmatpush.bf16.msra.mxu0 0
    %214 = vmatpush.bf16.msra.mxu0 0
    %215 = vmatpush.bf16.msra.mxu0 0
    %216 = vmatpush.bf16.msra.mxu0 %v154
    %217 = vmatmul.bf16.gmra.mxu0 %v128
    %v218 = vpop.f32.mrf.mxu0
    %v219 = vadd.f32 %v73, %v218
    %v220 = vpop.f32.mrf.mxu0
    %v221 = vadd.f32 %v73, %v220
    %222 = vmatmul.bf16.gmra.mxu0 %v131
    %v223 = vpop.f32.mrf.mxu0
    %v224 = vadd.f32 %v73, %v223
    %v225 = vpop.f32.mrf.mxu0
    %v226 = vadd.f32 %v73, %v225
    %227 = vmatmul.bf16.gmra.mxu0 %v134
    %v228 = vpop.f32.mrf.mxu0
    %v229 = vadd.f32 %v73, %v228
    %v230 = vpop.f32.mrf.mxu0
    %v231 = vadd.f32 %v73, %v230
    %232 = vmatmul.bf16.gmra.mxu0 %v137
    %v233 = vpop.f32.mrf.mxu0
    %v234 = vadd.f32 %v73, %v233
    %v235 = vpop.f32.mrf.mxu0
    %v236 = vadd.f32 %v73, %v235
    %237 = vmatmul.bf16.gmra.mxu0 %v140
    %v238 = vpop.f32.mrf.mxu0
    %v239 = vadd.f32 %v73, %v238
    %v240 = vpop.f32.mrf.mxu0
    %v241 = vadd.f32 %v73, %v240
    %242 = vmatmul.bf16.gmra.mxu0 %v143
    %v243 = vpop.f32.mrf.mxu0
    %v244 = vadd.f32 %v73, %v243
    %v245 = vpop.f32.mrf.mxu0
    %v246 = vadd.f32 %v73, %v245
    %247 = vmatmul.bf16.gmra.mxu0 %v146
    %v248 = vpop.f32.mrf.mxu0
    %v249 = vadd.f32 %v73, %v248
    %v250 = vpop.f32.mrf.mxu0
    %v251 = vadd.f32 %v73, %v250
    %252 = vmatmul.bf16.gmra.mxu0 %v149
    %v253 = vpop.f32.mrf.mxu0
    %v254 = vadd.f32 %v73, %v253
    %v255 = vpop.f32.mrf.mxu0
    %v256 = vadd.f32 %v73, %v255
    %257 = vdwg.mxu0
    %258 = vmatpush.bf16.msra.mxu0 0
    %259 = vmatpush.bf16.msra.mxu0 0
    %260 = vmatpush.bf16.msra.mxu0 0
    %261 = vmatpush.bf16.msra.mxu0 0
    %262 = vmatpush.bf16.msra.mxu0 0
    %263 = vmatpush.bf16.msra.mxu0 0
    %264 = vmatpush.bf16.msra.mxu0 0
    %265 = vmatpush.bf16.msra.mxu0 %v156
    %266 = vmatmul.bf16.gmra.mxu0 %v128
    %v267 = vpop.f32.mrf.mxu0
    %v268 = vadd.f32 %v74, %v267
    %v269 = vpop.f32.mrf.mxu0
    %v270 = vadd.f32 %v74, %v269
    %271 = vmatmul.bf16.gmra.mxu0 %v131
    %v272 = vpop.f32.mrf.mxu0
    %v273 = vadd.f32 %v74, %v272
    %v274 = vpop.f32.mrf.mxu0
    %v275 = vadd.f32 %v74, %v274
    %276 = vmatmul.bf16.gmra.mxu0 %v134
    %v277 = vpop.f32.mrf.mxu0
    %v278 = vadd.f32 %v74, %v277
    %v279 = vpop.f32.mrf.mxu0
    %v280 = vadd.f32 %v74, %v279
    %281 = vmatmul.bf16.gmra.mxu0 %v137
    %v282 = vpop.f32.mrf.mxu0
    %v283 = vadd.f32 %v74, %v282
    %v284 = vpop.f32.mrf.mxu0
    %v285 = vadd.f32 %v74, %v284
    %286 = vmatmul.bf16.gmra.mxu0 %v140
    %v287 = vpop.f32.mrf.mxu0
    %v288 = vadd.f32 %v74, %v287
    %v289 = vpop.f32.mrf.mxu0
    %v290 = vadd.f32 %v74, %v289
    %291 = vmatmul.bf16.gmra.mxu0 %v143
    %v292 = vpop.f32.mrf.mxu0
    %v293 = vadd.f32 %v74, %v292
    %v294 = vpop.f32.mrf.mxu0
    %v295 = vadd.f32 %v74, %v294
    %296 = vmatmul.bf16.gmra.mxu0 %v146
    %v297 = vpop.f32.mrf.mxu0
    %v298 = vadd.f32 %v74, %v297
    %v299 = vpop.f32.mrf.mxu0
    %v300 = vadd.f32 %v74, %v299
    %301 = vmatmul.bf16.gmra.mxu0 %v149
    %v302 = vpop.f32.mrf.mxu0
    %v303 = vadd.f32 %v74, %v302
    %v304 = vpop.f32.mrf.mxu0
    %v305 = vadd.f32 %v74, %v304
    %306 = vdwg.mxu0
    %307 = vmatpush.bf16.msra.mxu0 0
    %308 = vmatpush.bf16.msra.mxu0 0
    %309 = vmatpush.bf16.msra.mxu0 0
    %310 = vmatpush.bf16.msra.mxu0 0
    %311 = vmatpush.bf16.msra.mxu0 0
    %312 = vmatpush.bf16.msra.mxu0 0
    %313 = vmatpush.bf16.msra.mxu0 0
    %314 = vmatpush.bf16.msra.mxu0 %v158
    %315 = vmatmul.bf16.gmra.mxu0 %v128
    %v316 = vpop.f32.mrf.mxu0
    %v317 = vadd.f32 %v75, %v316
    %v318 = vpop.f32.mrf.mxu0
    %v319 = vadd.f32 %v75, %v318
    %320 = vmatmul.bf16.gmra.mxu0 %v131
    %v321 = vpop.f32.mrf.mxu0
    %v322 = vadd.f32 %v75, %v321
    %v323 = vpop.f32.mrf.mxu0
    %v324 = vadd.f32 %v75, %v323
    %325 = vmatmul.bf16.gmra.mxu0 %v134
    %v326 = vpop.f32.mrf.mxu0
    %v327 = vadd.f32 %v75, %v326
    %v328 = vpop.f32.mrf.mxu0
    %v329 = vadd.f32 %v75, %v328
    %330 = vmatmul.bf16.gmra.mxu0 %v137
    %v331 = vpop.f32.mrf.mxu0
    %v332 = vadd.f32 %v75, %v331
    %v333 = vpop.f32.mrf.mxu0
    %v334 = vadd.f32 %v75, %v333
    %335 = vmatmul.bf16.gmra.mxu0 %v140
    %v336 = vpop.f32.mrf.mxu0
    %v337 = vadd.f32 %v75, %v336
    %v338 = vpop.f32.mrf.mxu0
    %v339 = vadd.f32 %v75, %v338
    %340 = vmatmul.bf16.gmra.mxu0 %v143
    %v341 = vpop.f32.mrf.mxu0
    %v342 = vadd.f32 %v75, %v341
    %v343 = vpop.f32.mrf.mxu0
    %v344 = vadd.f32 %v75, %v343
    %345 = vmatmul.bf16.gmra.mxu0 %v146
    %v346 = vpop.f32.mrf.mxu0
    %v347 = vadd.f32 %v75, %v346
    %v348 = vpop.f32.mrf.mxu0
    %v349 = vadd.f32 %v75, %v348
    %350 = vmatmul.bf16.gmra.mxu0 %v149
    %v351 = vpop.f32.mrf.mxu0
    %v352 = vadd.f32 %v75, %v351
    %v353 = vpop.f32.mrf.mxu0
    %v354 = vadd.f32 %v75, %v353
    %355 = vdwg.mxu0
    %356 = vst [vmem:[#allocation2] sm:$0xff] %v170
    %357 = vst [vmem:[#allocation2 + $0x8] sm:$0xff] %v219
    %358 = vst [vmem:[#allocation2 + $0x10] sm:$0xff] %v268
    %359 = vst [vmem:[#allocation2 + $0x18] sm:$0xff] %v317
    %360 = vst [vmem:[#allocation2 + $0x20] sm:$0xff] %v172
    %361 = vst [vmem:[#allocation2 + $0x28] sm:$0xff] %v221
    %362 = vst [vmem:[#allocation2 + $0x30] sm:$0xff] %v270
    %363 = vst [vmem:[#allocation2 + $0x38] sm:$0xff] %v319
    %364 = vst [vmem:[#allocation2 + $0x40] sm:$0xff] %v175
    %365 = vst [vmem:[#allocation2 + $0x48] sm:$0xff] %v224
    %366 = vst [vmem:[#allocation2 + $0x50] sm:$0xff] %v273
    %367 = vst [vmem:[#allocation2 + $0x58] sm:$0xff] %v322
    %368 = vst [vmem:[#allocation2 + $0x60] sm:$0xff] %v177
    %369 = vst [vmem:[#allocation2 + $0x68] sm:$0xff] %v226
    %370 = vst [vmem:[#allocation2 + $0x70] sm:$0xff] %v275
    %371 = vst [vmem:[#allocation2 + $0x78] sm:$0xff] %v324
    %372 = vst [vmem:[#allocation2 + $0x80] sm:$0xff] %v180
    %373 = vst [vmem:[#allocation2 + $0x88] sm:$0xff] %v229
    %374 = vst [vmem:[#allocation2 + $0x90] sm:$0xff] %v278
    %375 = vst [vmem:[#allocation2 + $0x98] sm:$0xff] %v327
    %376 = vst [vmem:[#allocation2 + $0xa0] sm:$0xff] %v182
    %377 = vst [vmem:[#allocation2 + $0xa8] sm:$0xff] %v231
    %378 = vst [vmem:[#allocation2 + $0xb0] sm:$0xff] %v280
    %379 = vst [vmem:[#allocation2 + $0xb8] sm:$0xff] %v329
    %380 = vst [vmem:[#allocation2 + $0xc0] sm:$0xff] %v185
    %381 = vst [vmem:[#allocation2 + $0xc8] sm:$0xff] %v234
    %382 = vst [vmem:[#allocation2 + $0xd0] sm:$0xff] %v283
    %383 = vst [vmem:[#allocation2 + $0xd8] sm:$0xff] %v332
    %384 = vst [vmem:[#allocation2 + $0xe0] sm:$0xff] %v187
    %385 = vst [vmem:[#allocation2 + $0xe8] sm:$0xff] %v236
    %386 = vst [vmem:[#allocation2 + $0xf0] sm:$0xff] %v285
    %387 = vst [vmem:[#allocation2 + $0xf8] sm:$0xff] %v334
    %388 = vst [vmem:[#allocation2 + $0x100] sm:$0xff] %v190
    %389 = vst [vmem:[#allocation2 + $0x108] sm:$0xff] %v239
    %390 = vst [vmem:[#allocation2 + $0x110] sm:$0xff] %v288
    %391 = vst [vmem:[#allocation2 + $0x118] sm:$0xff] %v337
    %392 = vst [vmem:[#allocation2 + $0x120] sm:$0xff] %v192
    %393 = vst [vmem:[#allocation2 + $0x128] sm:$0xff] %v241
    %394 = vst [vmem:[#allocation2 + $0x130] sm:$0xff] %v290
    %395 = vst [vmem:[#allocation2 + $0x138] sm:$0xff] %v339
    %396 = vst [vmem:[#allocation2 + $0x140] sm:$0xff] %v195
    %397 = vst [vmem:[#allocation2 + $0x148] sm:$0xff] %v244
    %398 = vst [vmem:[#allocation2 + $0x150] sm:$0xff] %v293
    %399 = vst [vmem:[#allocation2 + $0x158] sm:$0xff] %v342
    %400 = vst [vmem:[#allocation2 + $0x160] sm:$0xff] %v197
    %401 = vst [vmem:[#allocation2 + $0x168] sm:$0xff] %v246
    %402 = vst [vmem:[#allocation2 + $0x170] sm:$0xff] %v295
    %403 = vst [vmem:[#allocation2 + $0x178] sm:$0xff] %v344
    %404 = vst [vmem:[#allocation2 + $0x180] sm:$0xff] %v200
    %405 = vst [vmem:[#allocation2 + $0x188] sm:$0xff] %v249
    %406 = vst [vmem:[#allocation2 + $0x190] sm:$0xff] %v298
    %407 = vst [vmem:[#allocation2 + $0x198] sm:$0xff] %v347
    %408 = vst [vmem:[#allocation2 + $0x1a0] sm:$0xff] %v202
    %409 = vst [vmem:[#allocation2 + $0x1a8] sm:$0xff] %v251
    %410 = vst [vmem:[#allocation2 + $0x1b0] sm:$0xff] %v300
    %411 = vst [vmem:[#allocation2 + $0x1b8] sm:$0xff] %v349
    %412 = vst [vmem:[#allocation2 + $0x1c0] sm:$0xff] %v205
    %413 = vst [vmem:[#allocation2 + $0x1c8] sm:$0xff] %v254
    %414 = vst [vmem:[#allocation2 + $0x1d0] sm:$0xff] %v303
    %415 = vst [vmem:[#allocation2 + $0x1d8] sm:$0xff] %v352
    %416 = vst [vmem:[#allocation2 + $0x1e0] sm:$0xff] %v207
    %417 = vst [vmem:[#allocation2 + $0x1e8] sm:$0xff] %v256
    %418 = vst [vmem:[#allocation2 + $0x1f0] sm:$0xff] %v305
    %419 = vst [vmem:[#allocation2 + $0x1f8] sm:$0xff] %v354
    %v420 = vld [vmem:[#allocation5] sm:$0xff]
    %v421 = vld [vmem:[#allocation5 + $0x8] sm:$0xff]
    %v422 = vld [vmem:[#allocation5 + $0x10] sm:$0xff]
    %v423 = vld [vmem:[#allocation5 + $0x18] sm:$0xff]
    %v424 = vld [vmem:[#allocation5 + $0x20] sm:$0xff]
    %v425 = vld [vmem:[#allocation5 + $0x28] sm:$0xff]
    %v426 = vld [vmem:[#allocation5 + $0x30] sm:$0xff]
    %v427 = vld [vmem:[#allocation5 + $0x38] sm:$0xff]
    %v428 = vld [vmem:[#allocation5 + $0x40] sm:$0xff]
    %v429 = vld [vmem:[#allocation5 + $0x48] sm:$0xff]
    %v430 = vld [vmem:[#allocation5 + $0x50] sm:$0xff]
    %v431 = vld [vmem:[#allocation5 + $0x58] sm:$0xff]
    %v432 = vld [vmem:[#allocation5 + $0x60] sm:$0xff]
    %v433 = vld [vmem:[#allocation5 + $0x68] sm:$0xff]
    %v434 = vld [vmem:[#allocation5 + $0x70] sm:$0xff]
    %v435 = vld [vmem:[#allocation5 + $0x78] sm:$0xff]
    %v436 = vld [vmem:[#allocation5 + $0x80] sm:$0xff]
    %v437 = vld [vmem:[#allocation5 + $0x88] sm:$0xff]
    %v438 = vld [vmem:[#allocation5 + $0x90] sm:$0xff]
    %v439 = vld [vmem:[#allocation5 + $0x98] sm:$0xff]
    %v440 = vld [vmem:[#allocation5 + $0xa0] sm:$0xff]
    %v441 = vld [vmem:[#allocation5 + $0xa8] sm:$0xff]
    %v442 = vld [vmem:[#allocation5 + $0xb0] sm:$0xff]
    %v443 = vld [vmem:[#allocation5 + $0xb8] sm:$0xff]
    %v444 = vld [vmem:[#allocation5 + $0xc0] sm:$0xff]
    %v445 = vld [vmem:[#allocation5 + $0xc8] sm:$0xff]
    %v446 = vld [vmem:[#allocation5 + $0xd0] sm:$0xff]
    %v447 = vld [vmem:[#allocation5 + $0xd8] sm:$0xff]
    %v448 = vld [vmem:[#allocation5 + $0xe0] sm:$0xff]
    %v449 = vld [vmem:[#allocation5 + $0xe8] sm:$0xff]
    %v450 = vld [vmem:[#allocation5 + $0xf0] sm:$0xff]
    %v451 = vld [vmem:[#allocation5 + $0xf8] sm:$0xff]
    %v452 = vld [vmem:[#allocation3] sm:$0xff]
    %v453 = vld [vmem:[#allocation3 + $0x8] sm:$0xff]
    %v454 = vld [vmem:[#allocation4] sm:$0xff]
    %v455 = vld [vmem:[#allocation4 + $0x8] sm:$0xff]
    %v456 = vld [vmem:[#allocation2] sm:$0xff]
    %v457 = vld [vmem:[#allocation2 + $0x8] sm:$0xff]
    %v458 = vld [vmem:[#allocation2 + $0x10] sm:$0xff]
    %v459 = vld [vmem:[#allocation2 + $0x18] sm:$0xff]
    %v460 = vld [vmem:[#allocation2 + $0x20] sm:$0xff]
    %v461 = vld [vmem:[#allocation2 + $0x28] sm:$0xff]
    %v462 = vld [vmem:[#allocation2 + $0x30] sm:$0xff]
    %v463 = vld [vmem:[#allocation2 + $0x38] sm:$0xff]
    %v464 = vpack.c.bf16 %v453, %v452
    %v497 = vunpack.c.l.b16 %v420
    %v498 = vunpack.c.h.b16 %v420
    %v499 = vunpack.c.l.b16 %v421
    %v500 = vunpack.c.h.b16 %v421
    %v501 = vunpack.c.l.b16 %v422
    %v502 = vunpack.c.h.b16 %v422
    %v503 = vunpack.c.l.b16 %v423
    %v504 = vunpack.c.h.b16 %v423
    %v505 = vunpack.c.l.b16 %v424
    %v506 = vunpack.c.h.b16 %v424
    %v507 = vunpack.c.l.b16 %v425
    %v508 = vunpack.c.h.b16 %v425
    %v509 = vunpack.c.l.b16 %v426
    %v510 = vunpack.c.h.b16 %v426
    %v511 = vunpack.c.l.b16 %v427
    %v512 = vunpack.c.h.b16 %v427
    %v513 = vunpack.c.l.b16 %v428
    %v514 = vunpack.c.h.b16 %v428
    %v515 = vunpack.c.l.b16 %v429
    %v516 = vunpack.c.h.b16 %v429
    %v517 = vunpack.c.l.b16 %v430
    %v518 = vunpack.c.h.b16 %v430
    %v519 = vunpack.c.l.b16 %v431
    %v520 = vunpack.c.h.b16 %v431
    %v521 = vunpack.c.l.b16 %v432
    %v522 = vunpack.c.h.b16 %v432
    %v523 = vunpack.c.l.b16 %v433
    %v524 = vunpack.c.h.b16 %v433
    %v525 = vunpack.c.l.b16 %v434
    %v526 = vunpack.c.h.b16 %v434
    %v527 = vunpack.c.l.b16 %v435
    %v528 = vunpack.c.h.b16 %v435
    %v529 = vunpack.c.l.b16 %v436
    %v530 = vunpack.c.h.b16 %v436
    %v531 = vunpack.c.l.b16 %v437
    %v532 = vunpack.c.h.b16 %v437
    %v533 = vunpack.c.l.b16 %v438
    %v534 = vunpack.c.h.b16 %v438
    %v535 = vunpack.c.l.b16 %v439
    %v536 = vunpack.c.h.b16 %v439
    %v537 = vunpack.c.l.b16 %v440
    %v538 = vunpack.c.h.b16 %v440
    %v539 = vunpack.c.l.b16 %v441
    %v540 = vunpack.c.h.b16 %v441
    %v541 = vunpack.c.l.b16 %v442
    %v542 = vunpack.c.h.b16 %v442
    %v543 = vunpack.c.l.b16 %v443
    %v544 = vunpack.c.h.b16 %v443
    %v545 = vunpack.c.l.b16 %v444
    %v546 = vunpack.c.h.b16 %v444
    %v547 = vunpack.c.l.b16 %v445
    %v548 = vunpack.c.h.b16 %v445
    %v549 = vunpack.c.l.b16 %v446
    %v550 = vunpack.c.h.b16 %v446
    %v551 = vunpack.c.l.b16 %v447
    %v552 = vunpack.c.h.b16 %v447
    %v553 = vunpack.c.l.b16 %v448
    %v554 = vunpack.c.h.b16 %v448
    %v555 = vunpack.c.l.b16 %v449
    %v556 = vunpack.c.h.b16 %v449
    %v557 = vunpack.c.l.b16 %v450
    %v558 = vunpack.c.h.b16 %v450
    %v559 = vunpack.c.l.b16 %v451
    %v560 = vunpack.c.h.b16 %v451
    %v561 = vpack.c.b16 %v501, %v497
    %v562 = vpack.c.b16 %v502, %v498
    %v563 = vpack.c.b16 %v503, %v499
    %v564 = vpack.c.b16 %v504, %v500
    %v565 = vpack.c.b16 %v509, %v505
    %v566 = vpack.c.b16 %v510, %v506
    %v567 = vpack.c.b16 %v511, %v507
    %v568 = vpack.c.b16 %v512, %v508
    %v569 = vpack.c.b16 %v517, %v513
    %v570 = vpack.c.b16 %v518, %v514
    %v571 = vpack.c.b16 %v519, %v515
    %v572 = vpack.c.b16 %v520, %v516
    %v573 = vpack.c.b16 %v525, %v521
    %v574 = vpack.c.b16 %v526, %v522
    %v575 = vpack.c.b16 %v527, %v523
    %v576 = vpack.c.b16 %v528, %v524
    %v577 = vpack.c.b16 %v533, %v529
    %v578 = vpack.c.b16 %v534, %v530
    %v579 = vpack.c.b16 %v535, %v531
    %v580 = vpack.c.b16 %v536, %v532
    %v581 = vpack.c.b16 %v541, %v537
    %v582 = vpack.c.b16 %v542, %v538
    %v583 = vpack.c.b16 %v543, %v539
    %v584 = vpack.c.b16 %v544, %v540
    %v585 = vpack.c.b16 %v549, %v545
    %v586 = vpack.c.b16 %v550, %v546
    %v587 = vpack.c.b16 %v551, %v547
    %v588 = vpack.c.b16 %v552, %v548
    %v589 = vpack.c.b16 %v557, %v553
    %v590 = vpack.c.b16 %v558, %v554
    %v591 = vpack.c.b16 %v559, %v555
    %v592 = vpack.c.b16 %v560, %v556
    %625 = vmatpush.bf16.msra.mxu0 %v589
    %626 = vmatpush.bf16.msra.mxu0 %v585
    %627 = vmatpush.bf16.msra.mxu0 %v581
    %628 = vmatpush.bf16.msra.mxu0 %v577
    %629 = vmatpush.bf16.msra.mxu0 %v573
    %630 = vmatpush.bf16.msra.mxu0 %v569
    %631 = vmatpush.bf16.msra.mxu0 %v565
    %632 = vmatpush.bf16.msra.mxu0 %v561
    %633 = vmatmul.bf16.gmra.mxu0 %v464
    %v634 = vpop.f32.mrf.mxu0
    %v635 = vadd.f32 0.0, %v634
    %v636 = vpop.f32.mrf.mxu0
    %v637 = vadd.f32 0.0, %v636
    %638 = vdwg.mxu0
    %639 = vmatpush.bf16.msra.mxu0 %v590
    %640 = vmatpush.bf16.msra.mxu0 %v586
    %641 = vmatpush.bf16.msra.mxu0 %v582
    %642 = vmatpush.bf16.msra.mxu0 %v578
    %643 = vmatpush.bf16.msra.mxu0 %v574
    %644 = vmatpush.bf16.msra.mxu0 %v570
    %645 = vmatpush.bf16.msra.mxu0 %v566
    %646 = vmatpush.bf16.msra.mxu0 %v562
    %647 = vmatmul.bf16.gmra.mxu0 %v464
    %v648 = vpop.f32.mrf.mxu0
    %v649 = vadd.f32 0.0, %v648
    %v650 = vpop.f32.mrf.mxu0
    %v651 = vadd.f32 0.0, %v650
    %652 = vdwg.mxu0
    %653 = vmatpush.bf16.msra.mxu0 %v591
    %654 = vmatpush.bf16.msra.mxu0 %v587
    %655 = vmatpush.bf16.msra.mxu0 %v583
    %656 = vmatpush.bf16.msra.mxu0 %v579
    %657 = vmatpush.bf16.msra.mxu0 %v575
    %658 = vmatpush.bf16.msra.mxu0 %v571
    %659 = vmatpush.bf16.msra.mxu0 %v567
    %660 = vmatpush.bf16.msra.mxu0 %v563
    %661 = vmatmul.bf16.gmra.mxu0 %v464
    %v662 = vpop.f32.mrf.mxu0
    %v663 = vadd.f32 0.0, %v662
    %v664 = vpop.f32.mrf.mxu0
    %v665 = vadd.f32 0.0, %v664
    %666 = vdwg.mxu0
    %667 = vmatpush.bf16.msra.mxu0 %v592
    %668 = vmatpush.bf16.msra.mxu0 %v588
    %669 = vmatpush.bf16.msra.mxu0 %v584
    %670 = vmatpush.bf16.msra.mxu0 %v580
    %671 = vmatpush.bf16.msra.mxu0 %v576
    %672 = vmatpush.bf16.msra.mxu0 %v572
    %673 = vmatpush.bf16.msra.mxu0 %v568
    %674 = vmatpush.bf16.msra.mxu0 %v564
    %675 = vmatmul.bf16.gmra.mxu0 %v464
    %v676 = vpop.f32.mrf.mxu0
    %v677 = vadd.f32 0.0, %v676
    %v678 = vpop.f32.mrf.mxu0
    %v679 = vadd.f32 0.0, %v678
    %680 = vdwg.mxu0
    %v681 = vadd.f32 %v456, %v635
    %v682 = vadd.f32 %v457, %v649
    %v683 = vadd.f32 %v458, %v663
    %v684 = vadd.f32 %v459, %v677
    %v685 = vadd.f32 %v460, %v637
    %v686 = vadd.f32 %v461, %v651
    %v687 = vadd.f32 %v462, %v665
    %v688 = vadd.f32 %v463, %v679
    %v689 = vxor.u32 %v681, 2147483648
    %v690 = vxor.u32 %v685, 2147483648
    %v691 = vmul.f32 %v689, 1.442695
    %v692 = vpow.pop %v691
    %v693 = vmul.f32 %v690, 1.442695
    %v694 = vpow.pop %v693
    %v695 = vadd.f32 %v692, 1.0
    %v696 = vadd.f32 %v694, 1.0
    %v697 = vrcp.pop %v695
    %v698 = vmul.f32 %v695, %v697
    %v699 = vsub.f32 1.0, %v698
    %v700 = vmul.f32 %v697, %v699
    %v701 = vadd.f32 %v697, %v700
    %vm702 = vweird.f32 %v695
    %vm703 = vweird.f32 %v697
    %vm704 = vmor %vm702, %vm703
    %v705 = vsel %vm704, %v697, %v701
    %v706 = vand.u32 2147483647, %v695
    %vm707 = vcmp.eq.f32.partialorder %v706, 8.507059e+37
    %v708 = vand.u32 %v695, 2147483648
    %v709 = vor.u32 1.1754944e-38, %v708
    %v710 = vsel %vm707, %v709, %v705
    %v711 = vmul.f32 1.0, %v710
    %v712 = vrcp.pop %v696
    %v713 = vmul.f32 %v696, %v712
    %v714 = vsub.f32 1.0, %v713
    %v715 = vmul.f32 %v712, %v714
    %v716 = vadd.f32 %v712, %v715
    %vm717 = vweird.f32 %v696
    %vm718 = vweird.f32 %v712
    %vm719 = vmor %vm717, %vm718
    %v720 = vsel %vm719, %v712, %v716
    %v721 = vand.u32 2147483647, %v696
    %vm722 = vcmp.eq.f32.partialorder %v721, 8.507059e+37
    %v723 = vand.u32 %v696, 2147483648
    %v724 = vor.u32 1.1754944e-38, %v723
    %v725 = vsel %vm722, %v724, %v720
    %v726 = vmul.f32 1.0, %v725
    %v727 = vxor.u32 %v682, 2147483648
    %v728 = vxor.u32 %v686, 2147483648
    %v729 = vmul.f32 %v727, 1.442695
    %v730 = vpow.pop %v729
    %v731 = vmul.f32 %v728, 1.442695
    %v732 = vpow.pop %v731
    %v733 = vadd.f32 %v730, 1.0
    %v734 = vadd.f32 %v732, 1.0
    %v735 = vrcp.pop %v733
    %v736 = vmul.f32 %v733, %v735
    %v737 = vsub.f32 1.0, %v736
    %v738 = vmul.f32 %v735, %v737
    %v739 = vadd.f32 %v735, %v738
    %vm740 = vweird.f32 %v733
    %vm741 = vweird.f32 %v735
    %vm742 = vmor %vm740, %vm741
    %v743 = vsel %vm742, %v735, %v739
    %v744 = vand.u32 2147483647, %v733
    %vm745 = vcmp.eq.f32.partialorder %v744, 8.507059e+37
    %v746 = vand.u32 %v733, 2147483648
    %v747 = vor.u32 1.1754944e-38, %v746
    %v748 = vsel %vm745, %v747, %v743
    %v749 = vmul.f32 1.0, %v748
    %v750 = vrcp.pop %v734
    %v751 = vmul.f32 %v734, %v750
    %v752 = vsub.f32 1.0, %v751
    %v753 = vmul.f32 %v750, %v752
    %v754 = vadd.f32 %v750, %v753
    %vm755 = vweird.f32 %v734
    %vm756 = vweird.f32 %v750
    %vm757 = vmor %vm755, %vm756
    %v758 = vsel %vm757, %v750, %v754
    %v759 = vand.u32 2147483647, %v734
    %vm760 = vcmp.eq.f32.partialorder %v759, 8.507059e+37
    %v761 = vand.u32 %v734, 2147483648
    %v762 = vor.u32 1.1754944e-38, %v761
    %v763 = vsel %vm760, %v762, %v758
    %v764 = vmul.f32 1.0, %v763
    %v765 = vtanh.pop %v683
    %v766 = vtanh.pop %v687
    %v767 = vxor.u32 %v684, 2147483648
    %v768 = vxor.u32 %v688, 2147483648
    %v769 = vmul.f32 %v767, 1.442695
    %v770 = vpow.pop %v769
    %v771 = vmul.f32 %v768, 1.442695
    %v772 = vpow.pop %v771
    %v773 = vadd.f32 %v770, 1.0
    %v774 = vadd.f32 %v772, 1.0
    %v775 = vrcp.pop %v773
    %v776 = vmul.f32 %v773, %v775
    %v777 = vsub.f32 1.0, %v776
    %v778 = vmul.f32 %v775, %v777
    %v779 = vadd.f32 %v775, %v778
    %vm780 = vweird.f32 %v773
    %vm781 = vweird.f32 %v775
    %vm782 = vmor %vm780, %vm781
    %v783 = vsel %vm782, %v775, %v779
    %v784 = vand.u32 2147483647, %v773
    %vm785 = vcmp.eq.f32.partialorder %v784, 8.507059e+37
    %v786 = vand.u32 %v773, 2147483648
    %v787 = vor.u32 1.1754944e-38, %v786
    %v788 = vsel %vm785, %v787, %v783
    %v789 = vmul.f32 1.0, %v788
    %v790 = vrcp.pop %v774
    %v791 = vmul.f32 %v774, %v790
    %v792 = vsub.f32 1.0, %v791
    %v793 = vmul.f32 %v790, %v792
    %v794 = vadd.f32 %v790, %v793
    %vm795 = vweird.f32 %v774
    %vm796 = vweird.f32 %v790
    %vm797 = vmor %vm795, %vm796
    %v798 = vsel %vm797, %v790, %v794
    %v799 = vand.u32 2147483647, %v774
    %vm800 = vcmp.eq.f32.partialorder %v799, 8.507059e+37
    %v801 = vand.u32 %v774, 2147483648
    %v802 = vor.u32 1.1754944e-38, %v801
    %v803 = vsel %vm800, %v802, %v798
    %v804 = vmul.f32 1.0, %v803
    %v805 = vmul.f32 %v749, %v454
    %v806 = vmul.f32 %v764, %v455
    %v807 = vmul.f32 %v711, %v765
    %v808 = vmul.f32 %v726, %v766
    %v809 = vadd.f32 %v805, %v807
    %v810 = vadd.f32 %v806, %v808
    %v811 = vtanh.pop %v809
    %v812 = vtanh.pop %v810
    %v813 = vmul.f32 %v789, %v811
    %v814 = vmul.f32 %v804, %v812
    %s815 = scalar_lea.vmem [#allocation2], 64
    %v816 = vld [vmem:[%s815] sm:$0xff]
    %v817 = vld [vmem:[%s815 + $0x8] sm:$0xff]
    %v818 = vld [vmem:[%s815 + $0x10] sm:$0xff]
    %v819 = vld [vmem:[%s815 + $0x18] sm:$0xff]
    %v820 = vld [vmem:[%s815 + $0x20] sm:$0xff]
    %v821 = vld [vmem:[%s815 + $0x28] sm:$0xff]
    %v822 = vld [vmem:[%s815 + $0x30] sm:$0xff]
    %v823 = vld [vmem:[%s815 + $0x38] sm:$0xff]
    %v824 = vpack.c.bf16 %v814, %v813
    %825 = vmatpush.bf16.msra.mxu0 %v589
    %826 = vmatpush.bf16.msra.mxu0 %v585
    %827 = vmatpush.bf16.msra.mxu0 %v581
    %828 = vmatpush.bf16.msra.mxu0 %v577
    %829 = vmatpush.bf16.msra.mxu0 %v573
    %830 = vmatpush.bf16.msra.mxu0 %v569
    %831 = vmatpush.bf16.msra.mxu0 %v565
    %832 = vmatpush.bf16.msra.mxu0 %v561
    %833 = vmatmul.bf16.gmra.mxu0 %v824
    %v834 = vpop.f32.mrf.mxu0
    %v835 = vadd.f32 0.0, %v834
    %v836 = vpop.f32.mrf.mxu0
    %v837 = vadd.f32 0.0, %v836
    %838 = vdwg.mxu0
    %839 = vmatpush.bf16.msra.mxu0 %v590
    %840 = vmatpush.bf16.msra.mxu0 %v586
    %841 = vmatpush.bf16.msra.mxu0 %v582
    %842 = vmatpush.bf16.msra.mxu0 %v578
    %843 = vmatpush.bf16.msra.mxu0 %v574
    %844 = vmatpush.bf16.msra.mxu0 %v570
    %845 = vmatpush.bf16.msra.mxu0 %v566
    %846 = vmatpush.bf16.msra.mxu0 %v562
    %847 = vmatmul.bf16.gmra.mxu0 %v824
    %v848 = vpop.f32.mrf.mxu0
    %v849 = vadd.f32 0.0, %v848
    %v850 = vpop.f32.mrf.mxu0
    %v851 = vadd.f32 0.0, %v850
    %852 = vdwg.mxu0
    %853 = vmatpush.bf16.msra.mxu0 %v591
    %854 = vmatpush.bf16.msra.mxu0 %v587
    %855 = vmatpush.bf16.msra.mxu0 %v583
    %856 = vmatpush.bf16.msra.mxu0 %v579
    %857 = vmatpush.bf16.msra.mxu0 %v575
    %858 = vmatpush.bf16.msra.mxu0 %v571
    %859 = vmatpush.bf16.msra.mxu0 %v567
    %860 = vmatpush.bf16.msra.mxu0 %v563
    %861 = vmatmul.bf16.gmra.mxu0 %v824
    %v862 = vpop.f32.mrf.mxu0
    %v863 = vadd.f32 0.0, %v862
    %v864 = vpop.f32.mrf.mxu0
    %v865 = vadd.f32 0.0, %v864
    %866 = vdwg.mxu0
    %867 = vmatpush.bf16.msra.mxu0 %v592
    %868 = vmatpush.bf16.msra.mxu0 %v588
    %869 = vmatpush.bf16.msra.mxu0 %v584
    %870 = vmatpush.bf16.msra.mxu0 %v580
    %871 = vmatpush.bf16.msra.mxu0 %v576
    %872 = vmatpush.bf16.msra.mxu0 %v572
    %873 = vmatpush.bf16.msra.mxu0 %v568
    %874 = vmatpush.bf16.msra.mxu0 %v564
    %875 = vmatmul.bf16.gmra.mxu0 %v824
    %v876 = vpop.f32.mrf.mxu0
    %v877 = vadd.f32 0.0, %v876
    %v878 = vpop.f32.mrf.mxu0
    %v879 = vadd.f32 0.0, %v878
    %880 = vdwg.mxu0
    %v881 = vadd.f32 %v816, %v835
    %v882 = vadd.f32 %v817, %v849
    %v883 = vadd.f32 %v818, %v863
    %v884 = vadd.f32 %v819, %v877
    %v885 = vadd.f32 %v820, %v837
    %v886 = vadd.f32 %v821, %v851
    %v887 = vadd.f32 %v822, %v865
    %v888 = vadd.f32 %v823, %v879
    %v889 = vxor.u32 %v881, 2147483648
    %v890 = vxor.u32 %v885, 2147483648
    %v891 = vmul.f32 %v889, 1.442695
    %v892 = vpow.pop %v891
    %v893 = vmul.f32 %v890, 1.442695
    %v894 = vpow.pop %v893
    %v895 = vadd.f32 %v892, 1.0
    %v896 = vadd.f32 %v894, 1.0
    %v897 = vrcp.pop %v895
    %v898 = vmul.f32 %v895, %v897
    %v899 = vsub.f32 1.0, %v898
    %v900 = vmul.f32 %v897, %v899
    %v901 = vadd.f32 %v897, %v900
    %vm902 = vweird.f32 %v895
    %vm903 = vweird.f32 %v897
    %vm904 = vmor %vm902, %vm903
    %v905 = vsel %vm904, %v897, %v901
    %v906 = vand.u32 2147483647, %v895
    %vm907 = vcmp.eq.f32.partialorder %v906, 8.507059e+37
    %v908 = vand.u32 %v895, 2147483648
    %v909 = vor.u32 1.1754944e-38, %v908
    %v910 = vsel %vm907, %v909, %v905
    %v911 = vmul.f32 1.0, %v910
    %v912 = vrcp.pop %v896
    %v913 = vmul.f32 %v896, %v912
    %v914 = vsub.f32 1.0, %v913
    %v915 = vmul.f32 %v912, %v914
    %v916 = vadd.f32 %v912, %v915
    %vm917 = vweird.f32 %v896
    %vm918 = vweird.f32 %v912
    %vm919 = vmor %vm917, %vm918
    %v920 = vsel %vm919, %v912, %v916
    %v921 = vand.u32 2147483647, %v896
    %vm922 = vcmp.eq.f32.partialorder %v921, 8.507059e+37
    %v923 = vand.u32 %v896, 2147483648
    %v924 = vor.u32 1.1754944e-38, %v923
    %v925 = vsel %vm922, %v924, %v920
    %v926 = vmul.f32 1.0, %v925
    %v927 = vxor.u32 %v882, 2147483648
    %v928 = vxor.u32 %v886, 2147483648
    %v929 = vmul.f32 %v927, 1.442695
    %v930 = vpow.pop %v929
    %v931 = vmul.f32 %v928, 1.442695
    %v932 = vpow.pop %v931
    %v933 = vadd.f32 %v930, 1.0
    %v934 = vadd.f32 %v932, 1.0
    %v935 = vrcp.pop %v933
    %v936 = vmul.f32 %v933, %v935
    %v937 = vsub.f32 1.0, %v936
    %v938 = vmul.f32 %v935, %v937
    %v939 = vadd.f32 %v935, %v938
    %vm940 = vweird.f32 %v933
    %vm941 = vweird.f32 %v935
    %vm942 = vmor %vm940, %vm941
    %v943 = vsel %vm942, %v935, %v939
    %v944 = vand.u32 2147483647, %v933
    %vm945 = vcmp.eq.f32.partialorder %v944, 8.507059e+37
    %v946 = vand.u32 %v933, 2147483648
    %v947 = vor.u32 1.1754944e-38, %v946
    %v948 = vsel %vm945, %v947, %v943
    %v949 = vmul.f32 1.0, %v948
    %v950 = vrcp.pop %v934
    %v951 = vmul.f32 %v934, %v950
    %v952 = vsub.f32 1.0, %v951
    %v953 = vmul.f32 %v950, %v952
    %v954 = vadd.f32 %v950, %v953
    %vm955 = vweird.f32 %v934
    %vm956 = vweird.f32 %v950
    %vm957 = vmor %vm955, %vm956
    %v958 = vsel %vm957, %v950, %v954
    %v959 = vand.u32 2147483647, %v934
    %vm960 = vcmp.eq.f32.partialorder %v959, 8.507059e+37
    %v961 = vand.u32 %v934, 2147483648
    %v962 = vor.u32 1.1754944e-38, %v961
    %v963 = vsel %vm960, %v962, %v958
    %v964 = vmul.f32 1.0, %v963
    %v965 = vtanh.pop %v883
    %v966 = vtanh.pop %v887
    %v967 = vxor.u32 %v884, 2147483648
    %v968 = vxor.u32 %v888, 2147483648
    %v969 = vmul.f32 %v967, 1.442695
    %v970 = vpow.pop %v969
    %v971 = vmul.f32 %v968, 1.442695
    %v972 = vpow.pop %v971
    %v973 = vadd.f32 %v970, 1.0
    %v974 = vadd.f32 %v972, 1.0
    %v975 = vrcp.pop %v973
    %v976 = vmul.f32 %v973, %v975
    %v977 = vsub.f32 1.0, %v976
    %v978 = vmul.f32 %v975, %v977
    %v979 = vadd.f32 %v975, %v978
    %vm980 = vweird.f32 %v973
    %vm981 = vweird.f32 %v975
    %vm982 = vmor %vm980, %vm981
    %v983 = vsel %vm982, %v975, %v979
    %v984 = vand.u32 2147483647, %v973
    %vm985 = vcmp.eq.f32.partialorder %v984, 8.507059e+37
    %v986 = vand.u32 %v973, 2147483648
    %v987 = vor.u32 1.1754944e-38, %v986
    %v988 = vsel %vm985, %v987, %v983
    %v989 = vmul.f32 1.0, %v988
    %v990 = vrcp.pop %v974
    %v991 = vmul.f32 %v974, %v990
    %v992 = vsub.f32 1.0, %v991
    %v993 = vmul.f32 %v990, %v992
    %v994 = vadd.f32 %v990, %v993
    %vm995 = vweird.f32 %v974
    %vm996 = vweird.f32 %v990
    %vm997 = vmor %vm995, %vm996
    %v998 = vsel %vm997, %v990, %v994
    %v999 = vand.u32 2147483647, %v974
    %vm1000 = vcmp.eq.f32.partialorder %v999, 8.507059e+37
    %v1001 = vand.u32 %v974, 2147483648
    %v1002 = vor.u32 1.1754944e-38, %v1001
    %v1003 = vsel %vm1000, %v1002, %v998
    %v1004 = vmul.f32 1.0, %v1003
    %v1005 = vmul.f32 %v949, %v809
    %v1006 = vmul.f32 %v964, %v810
    %v1007 = vmul.f32 %v911, %v965
    %v1008 = vmul.f32 %v926, %v966
    %v1009 = vadd.f32 %v1005, %v1007
    %v1010 = vadd.f32 %v1006, %v1008
    %v1011 = vtanh.pop %v1009
    %v1012 = vtanh.pop %v1010
    %v1013 = vmul.f32 %v989, %v1011
    %v1014 = vmul.f32 %v1004, %v1012
    %s1015 = scalar_lea.vmem [#allocation2], 128
    %v1016 = vld [vmem:[%s1015] sm:$0xff]
    %v1017 = vld [vmem:[%s1015 + $0x8] sm:$0xff]
    %v1018 = vld [vmem:[%s1015 + $0x10] sm:$0xff]
    %v1019 = vld [vmem:[%s1015 + $0x18] sm:$0xff]
    %v1020 = vld [vmem:[%s1015 + $0x20] sm:$0xff]
    %v1021 = vld [vmem:[%s1015 + $0x28] sm:$0xff]
    %v1022 = vld [vmem:[%s1015 + $0x30] sm:$0xff]
    %v1023 = vld [vmem:[%s1015 + $0x38] sm:$0xff]
    %v1024 = vpack.c.bf16 %v1014, %v1013
    %1025 = vmatpush.bf16.msra.mxu0 %v589
    %1026 = vmatpush.bf16.msra.mxu0 %v585
    %1027 = vmatpush.bf16.msra.mxu0 %v581
    %1028 = vmatpush.bf16.msra.mxu0 %v577
    %1029 = vmatpush.bf16.msra.mxu0 %v573
    %1030 = vmatpush.bf16.msra.mxu0 %v569
    %1031 = vmatpush.bf16.msra.mxu0 %v565
    %1032 = vmatpush.bf16.msra.mxu0 %v561
    %1033 = vmatmul.bf16.gmra.mxu0 %v1024
    %v1034 = vpop.f32.mrf.mxu0
    %v1035 = vadd.f32 0.0, %v1034
    %v1036 = vpop.f32.mrf.mxu0
    %v1037 = vadd.f32 0.0, %v1036
    %1038 = vdwg.mxu0
    %1039 = vmatpush.bf16.msra.mxu0 %v590
    %1040 = vmatpush.bf16.msra.mxu0 %v586
    %1041 = vmatpush.bf16.msra.mxu0 %v582
    %1042 = vmatpush.bf16.msra.mxu0 %v578
    %1043 = vmatpush.bf16.msra.mxu0 %v574
    %1044 = vmatpush.bf16.msra.mxu0 %v570
    %1045 = vmatpush.bf16.msra.mxu0 %v566
    %1046 = vmatpush.bf16.msra.mxu0 %v562
    %1047 = vmatmul.bf16.gmra.mxu0 %v1024
    %v1048 = vpop.f32.mrf.mxu0
    %v1049 = vadd.f32 0.0, %v1048
    %v1050 = vpop.f32.mrf.mxu0
    %v1051 = vadd.f32 0.0, %v1050
    %1052 = vdwg.mxu0
    %1053 = vmatpush.bf16.msra.mxu0 %v591
    %1054 = vmatpush.bf16.msra.mxu0 %v587
    %1055 = vmatpush.bf16.msra.mxu0 %v583
    %1056 = vmatpush.bf16.msra.mxu0 %v579
    %1057 = vmatpush.bf16.msra.mxu0 %v575
    %1058 = vmatpush.bf16.msra.mxu0 %v571
    %1059 = vmatpush.bf16.msra.mxu0 %v567
    %1060 = vmatpush.bf16.msra.mxu0 %v563
    %1061 = vmatmul.bf16.gmra.mxu0 %v1024
    %v1062 = vpop.f32.mrf.mxu0
    %v1063 = vadd.f32 0.0, %v1062
    %v1064 = vpop.f32.mrf.mxu0
    %v1065 = vadd.f32 0.0, %v1064
    %1066 = vdwg.mxu0
    %1067 = vmatpush.bf16.msra.mxu0 %v592
    %1068 = vmatpush.bf16.msra.mxu0 %v588
    %1069 = vmatpush.bf16.msra.mxu0 %v584
    %1070 = vmatpush.bf16.msra.mxu0 %v580
    %1071 = vmatpush.bf16.msra.mxu0 %v576
    %1072 = vmatpush.bf16.msra.mxu0 %v572
    %1073 = vmatpush.bf16.msra.mxu0 %v568
    %1074 = vmatpush.bf16.msra.mxu0 %v564
    %1075 = vmatmul.bf16.gmra.mxu0 %v1024
    %v1076 = vpop.f32.mrf.mxu0
    %v1077 = vadd.f32 0.0, %v1076
    %v1078 = vpop.f32.mrf.mxu0
    %v1079 = vadd.f32 0.0, %v1078
    %1080 = vdwg.mxu0
    %v1081 = vadd.f32 %v1016, %v1035
    %v1082 = vadd.f32 %v1017, %v1049
    %v1083 = vadd.f32 %v1018, %v1063
    %v1084 = vadd.f32 %v1019, %v1077
    %v1085 = vadd.f32 %v1020, %v1037
    %v1086 = vadd.f32 %v1021, %v1051
    %v1087 = vadd.f32 %v1022, %v1065
    %v1088 = vadd.f32 %v1023, %v1079
    %v1089 = vxor.u32 %v1081, 2147483648
    %v1090 = vxor.u32 %v1085, 2147483648
    %v1091 = vmul.f32 %v1089, 1.442695
    %v1092 = vpow.pop %v1091
    %v1093 = vmul.f32 %v1090, 1.442695
    %v1094 = vpow.pop %v1093
    %v1095 = vadd.f32 %v1092, 1.0
    %v1096 = vadd.f32 %v1094, 1.0
    %v1097 = vrcp.pop %v1095
    %v1098 = vmul.f32 %v1095, %v1097
    %v1099 = vsub.f32 1.0, %v1098
    %v1100 = vmul.f32 %v1097, %v1099
    %v1101 = vadd.f32 %v1097, %v1100
    %vm1102 = vweird.f32 %v1095
    %vm1103 = vweird.f32 %v1097
    %vm1104 = vmor %vm1102, %vm1103
    %v1105 = vsel %vm1104, %v1097, %v1101
    %v1106 = vand.u32 2147483647, %v1095
    %vm1107 = vcmp.eq.f32.partialorder %v1106, 8.507059e+37
    %v1108 = vand.u32 %v1095, 2147483648
    %v1109 = vor.u32 1.1754944e-38, %v1108
    %v1110 = vsel %vm1107, %v1109, %v1105
    %v1111 = vmul.f32 1.0, %v1110
    %v1112 = vrcp.pop %v1096
    %v1113 = vmul.f32 %v1096, %v1112
    %v1114 = vsub.f32 1.0, %v1113
    %v1115 = vmul.f32 %v1112, %v1114
    %v1116 = vadd.f32 %v1112, %v1115
    %vm1117 = vweird.f32 %v1096
    %vm1118 = vweird.f32 %v1112
    %vm1119 = vmor %vm1117, %vm1118
    %v1120 = vsel %vm1119, %v1112, %v1116
    %v1121 = vand.u32 2147483647, %v1096
    %vm1122 = vcmp.eq.f32.partialorder %v1121, 8.507059e+37
    %v1123 = vand.u32 %v1096, 2147483648
    %v1124 = vor.u32 1.1754944e-38, %v1123
    %v1125 = vsel %vm1122, %v1124, %v1120
    %v1126 = vmul.f32 1.0, %v1125
    %v1127 = vxor.u32 %v1082, 2147483648
    %v1128 = vxor.u32 %v1086, 2147483648
    %v1129 = vmul.f32 %v1127, 1.442695
    %v1130 = vpow.pop %v1129
    %v1131 = vmul.f32 %v1128, 1.442695
    %v1132 = vpow.pop %v1131
    %v1133 = vadd.f32 %v1130, 1.0
    %v1134 = vadd.f32 %v1132, 1.0
    %v1135 = vrcp.pop %v1133
    %v1136 = vmul.f32 %v1133, %v1135
    %v1137 = vsub.f32 1.0, %v1136
    %v1138 = vmul.f32 %v1135, %v1137
    %v1139 = vadd.f32 %v1135, %v1138
    %vm1140 = vweird.f32 %v1133
    %vm1141 = vweird.f32 %v1135
    %vm1142 = vmor %vm1140, %vm1141
    %v1143 = vsel %vm1142, %v1135, %v1139
    %v1144 = vand.u32 2147483647, %v1133
    %vm1145 = vcmp.eq.f32.partialorder %v1144, 8.507059e+37
    %v1146 = vand.u32 %v1133, 2147483648
    %v1147 = vor.u32 1.1754944e-38, %v1146
    %v1148 = vsel %vm1145, %v1147, %v1143
    %v1149 = vmul.f32 1.0, %v1148
    %v1150 = vrcp.pop %v1134
    %v1151 = vmul.f32 %v1134, %v1150
    %v1152 = vsub.f32 1.0, %v1151
    %v1153 = vmul.f32 %v1150, %v1152
    %v1154 = vadd.f32 %v1150, %v1153
    %vm1155 = vweird.f32 %v1134
    %vm1156 = vweird.f32 %v1150
    %vm1157 = vmor %vm1155, %vm1156
    %v1158 = vsel %vm1157, %v1150, %v1154
    %v1159 = vand.u32 2147483647, %v1134
    %vm1160 = vcmp.eq.f32.partialorder %v1159, 8.507059e+37
    %v1161 = vand.u32 %v1134, 2147483648
    %v1162 = vor.u32 1.1754944e-38, %v1161
    %v1163 = vsel %vm1160, %v1162, %v1158
    %v1164 = vmul.f32 1.0, %v1163
    %v1165 = vtanh.pop %v1083
    %v1166 = vtanh.pop %v1087
    %v1167 = vxor.u32 %v1084, 2147483648
    %v1168 = vxor.u32 %v1088, 2147483648
    %v1169 = vmul.f32 %v1167, 1.442695
    %v1170 = vpow.pop %v1169
    %v1171 = vmul.f32 %v1168, 1.442695
    %v1172 = vpow.pop %v1171
    %v1173 = vadd.f32 %v1170, 1.0
    %v1174 = vadd.f32 %v1172, 1.0
    %v1175 = vrcp.pop %v1173
    %v1176 = vmul.f32 %v1173, %v1175
    %v1177 = vsub.f32 1.0, %v1176
    %v1178 = vmul.f32 %v1175, %v1177
    %v1179 = vadd.f32 %v1175, %v1178
    %vm1180 = vweird.f32 %v1173
    %vm1181 = vweird.f32 %v1175
    %vm1182 = vmor %vm1180, %vm1181
    %v1183 = vsel %vm1182, %v1175, %v1179
    %v1184 = vand.u32 2147483647, %v1173
    %vm1185 = vcmp.eq.f32.partialorder %v1184, 8.507059e+37
    %v1186 = vand.u32 %v1173, 2147483648
    %v1187 = vor.u32 1.1754944e-38, %v1186
    %v1188 = vsel %vm1185, %v1187, %v1183
    %v1189 = vmul.f32 1.0, %v1188
    %v1190 = vrcp.pop %v1174
    %v1191 = vmul.f32 %v1174, %v1190
    %v1192 = vsub.f32 1.0, %v1191
    %v1193 = vmul.f32 %v1190, %v1192
    %v1194 = vadd.f32 %v1190, %v1193
    %vm1195 = vweird.f32 %v1174
    %vm1196 = vweird.f32 %v1190
    %vm1197 = vmor %vm1195, %vm1196
    %v1198 = vsel %vm1197, %v1190, %v1194
    %v1199 = vand.u32 2147483647, %v1174
    %vm1200 = vcmp.eq.f32.partialorder %v1199, 8.507059e+37
    %v1201 = vand.u32 %v1174, 2147483648
    %v1202 = vor.u32 1.1754944e-38, %v1201
    %v1203 = vsel %vm1200, %v1202, %v1198
    %v1204 = vmul.f32 1.0, %v1203
    %v1205 = vmul.f32 %v1149, %v1009
    %v1206 = vmul.f32 %v1164, %v1010
    %v1207 = vmul.f32 %v1111, %v1165
    %v1208 = vmul.f32 %v1126, %v1166
    %v1209 = vadd.f32 %v1205, %v1207
    %v1210 = vadd.f32 %v1206, %v1208
    %v1211 = vtanh.pop %v1209
    %v1212 = vtanh.pop %v1210
    %v1213 = vmul.f32 %v1189, %v1211
    %v1214 = vmul.f32 %v1204, %v1212
    %s1215 = scalar_lea.vmem [#allocation2], 192
    %v1216 = vld [vmem:[%s1215] sm:$0xff]
    %v1217 = vld [vmem:[%s1215 + $0x8] sm:$0xff]
    %v1218 = vld [vmem:[%s1215 + $0x10] sm:$0xff]
    %v1219 = vld [vmem:[%s1215 + $0x18] sm:$0xff]
    %v1220 = vld [vmem:[%s1215 + $0x20] sm:$0xff]
    %v1221 = vld [vmem:[%s1215 + $0x28] sm:$0xff]
    %v1222 = vld [vmem:[%s1215 + $0x30] sm:$0xff]
    %v1223 = vld [vmem:[%s1215 + $0x38] sm:$0xff]
    %v1224 = vpack.c.bf16 %v1214, %v1213
    %1225 = vmatpush.bf16.msra.mxu0 %v589
    %1226 = vmatpush.bf16.msra.mxu0 %v585
    %1227 = vmatpush.bf16.msra.mxu0 %v581
    %1228 = vmatpush.bf16.msra.mxu0 %v577
    %1229 = vmatpush.bf16.msra.mxu0 %v573
    %1230 = vmatpush.bf16.msra.mxu0 %v569
    %1231 = vmatpush.bf16.msra.mxu0 %v565
    %1232 = vmatpush.bf16.msra.mxu0 %v561
    %1233 = vmatmul.bf16.gmra.mxu0 %v1224
    %v1234 = vpop.f32.mrf.mxu0
    %v1235 = vadd.f32 0.0, %v1234
    %v1236 = vpop.f32.mrf.mxu0
    %v1237 = vadd.f32 0.0, %v1236
    %1238 = vdwg.mxu0
    %1239 = vmatpush.bf16.msra.mxu0 %v590
    %1240 = vmatpush.bf16.msra.mxu0 %v586
    %1241 = vmatpush.bf16.msra.mxu0 %v582
    %1242 = vmatpush.bf16.msra.mxu0 %v578
    %1243 = vmatpush.bf16.msra.mxu0 %v574
    %1244 = vmatpush.bf16.msra.mxu0 %v570
    %1245 = vmatpush.bf16.msra.mxu0 %v566
    %1246 = vmatpush.bf16.msra.mxu0 %v562
    %1247 = vmatmul.bf16.gmra.mxu0 %v1224
    %v1248 = vpop.f32.mrf.mxu0
    %v1249 = vadd.f32 0.0, %v1248
    %v1250 = vpop.f32.mrf.mxu0
    %v1251 = vadd.f32 0.0, %v1250
    %1252 = vdwg.mxu0
    %1253 = vmatpush.bf16.msra.mxu0 %v591
    %1254 = vmatpush.bf16.msra.mxu0 %v587
    %1255 = vmatpush.bf16.msra.mxu0 %v583
    %1256 = vmatpush.bf16.msra.mxu0 %v579
    %1257 = vmatpush.bf16.msra.mxu0 %v575
    %1258 = vmatpush.bf16.msra.mxu0 %v571
    %1259 = vmatpush.bf16.msra.mxu0 %v567
    %1260 = vmatpush.bf16.msra.mxu0 %v563
    %1261 = vmatmul.bf16.gmra.mxu0 %v1224
    %v1262 = vpop.f32.mrf.mxu0
    %v1263 = vadd.f32 0.0, %v1262
    %v1264 = vpop.f32.mrf.mxu0
    %v1265 = vadd.f32 0.0, %v1264
    %1266 = vdwg.mxu0
    %1267 = vmatpush.bf16.msra.mxu0 %v592
    %1268 = vmatpush.bf16.msra.mxu0 %v588
    %1269 = vmatpush.bf16.msra.mxu0 %v584
    %1270 = vmatpush.bf16.msra.mxu0 %v580
    %1271 = vmatpush.bf16.msra.mxu0 %v576
    %1272 = vmatpush.bf16.msra.mxu0 %v572
    %1273 = vmatpush.bf16.msra.mxu0 %v568
    %1274 = vmatpush.bf16.msra.mxu0 %v564
    %1275 = vmatmul.bf16.gmra.mxu0 %v1224
    %v1276 = vpop.f32.mrf.mxu0
    %v1277 = vadd.f32 0.0, %v1276
    %v1278 = vpop.f32.mrf.mxu0
    %v1279 = vadd.f32 0.0, %v1278
    %1280 = vdwg.mxu0
    %v1281 = vadd.f32 %v1216, %v1235
    %v1282 = vadd.f32 %v1217, %v1249
    %v1283 = vadd.f32 %v1218, %v1263
    %v1284 = vadd.f32 %v1219, %v1277
    %v1285 = vadd.f32 %v1220, %v1237
    %v1286 = vadd.f32 %v1221, %v1251
    %v1287 = vadd.f32 %v1222, %v1265
    %v1288 = vadd.f32 %v1223, %v1279
    %v1289 = vxor.u32 %v1281, 2147483648
    %v1290 = vxor.u32 %v1285, 2147483648
    %v1291 = vmul.f32 %v1289, 1.442695
    %v1292 = vpow.pop %v1291
    %v1293 = vmul.f32 %v1290, 1.442695
    %v1294 = vpow.pop %v1293
    %v1295 = vadd.f32 %v1292, 1.0
    %v1296 = vadd.f32 %v1294, 1.0
    %v1297 = vrcp.pop %v1295
    %v1298 = vmul.f32 %v1295, %v1297
    %v1299 = vsub.f32 1.0, %v1298
    %v1300 = vmul.f32 %v1297, %v1299
    %v1301 = vadd.f32 %v1297, %v1300
    %vm1302 = vweird.f32 %v1295
    %vm1303 = vweird.f32 %v1297
    %vm1304 = vmor %vm1302, %vm1303
    %v1305 = vsel %vm1304, %v1297, %v1301
    %v1306 = vand.u32 2147483647, %v1295
    %vm1307 = vcmp.eq.f32.partialorder %v1306, 8.507059e+37
    %v1308 = vand.u32 %v1295, 2147483648
    %v1309 = vor.u32 1.1754944e-38, %v1308
    %v1310 = vsel %vm1307, %v1309, %v1305
    %v1311 = vmul.f32 1.0, %v1310
    %v1312 = vrcp.pop %v1296
    %v1313 = vmul.f32 %v1296, %v1312
    %v1314 = vsub.f32 1.0, %v1313
    %v1315 = vmul.f32 %v1312, %v1314
    %v1316 = vadd.f32 %v1312, %v1315
    %vm1317 = vweird.f32 %v1296
    %vm1318 = vweird.f32 %v1312
    %vm1319 = vmor %vm1317, %vm1318
    %v1320 = vsel %vm1319, %v1312, %v1316
    %v1321 = vand.u32 2147483647, %v1296
    %vm1322 = vcmp.eq.f32.partialorder %v1321, 8.507059e+37
    %v1323 = vand.u32 %v1296, 2147483648
    %v1324 = vor.u32 1.1754944e-38, %v1323
    %v1325 = vsel %vm1322, %v1324, %v1320
    %v1326 = vmul.f32 1.0, %v1325
    %v1327 = vxor.u32 %v1282, 2147483648
    %v1328 = vxor.u32 %v1286, 2147483648
    %v1329 = vmul.f32 %v1327, 1.442695
    %v1330 = vpow.pop %v1329
    %v1331 = vmul.f32 %v1328, 1.442695
    %v1332 = vpow.pop %v1331
    %v1333 = vadd.f32 %v1330, 1.0
    %v1334 = vadd.f32 %v1332, 1.0
    %v1335 = vrcp.pop %v1333
    %v1336 = vmul.f32 %v1333, %v1335
    %v1337 = vsub.f32 1.0, %v1336
    %v1338 = vmul.f32 %v1335, %v1337
    %v1339 = vadd.f32 %v1335, %v1338
    %vm1340 = vweird.f32 %v1333
    %vm1341 = vweird.f32 %v1335
    %vm1342 = vmor %vm1340, %vm1341
    %v1343 = vsel %vm1342, %v1335, %v1339
    %v1344 = vand.u32 2147483647, %v1333
    %vm1345 = vcmp.eq.f32.partialorder %v1344, 8.507059e+37
    %v1346 = vand.u32 %v1333, 2147483648
    %v1347 = vor.u32 1.1754944e-38, %v1346
    %v1348 = vsel %vm1345, %v1347, %v1343
    %v1349 = vmul.f32 1.0, %v1348
    %v1350 = vrcp.pop %v1334
    %v1351 = vmul.f32 %v1334, %v1350
    %v1352 = vsub.f32 1.0, %v1351
    %v1353 = vmul.f32 %v1350, %v1352
    %v1354 = vadd.f32 %v1350, %v1353
    %vm1355 = vweird.f32 %v1334
    %vm1356 = vweird.f32 %v1350
    %vm1357 = vmor %vm1355, %vm1356
    %v1358 = vsel %vm1357, %v1350, %v1354
    %v1359 = vand.u32 2147483647, %v1334
    %vm1360 = vcmp.eq.f32.partialorder %v1359, 8.507059e+37
    %v1361 = vand.u32 %v1334, 2147483648
    %v1362 = vor.u32 1.1754944e-38, %v1361
    %v1363 = vsel %vm1360, %v1362, %v1358
    %v1364 = vmul.f32 1.0, %v1363
    %v1365 = vtanh.pop %v1283
    %v1366 = vtanh.pop %v1287
    %v1367 = vxor.u32 %v1284, 2147483648
    %v1368 = vxor.u32 %v1288, 2147483648
    %v1369 = vmul.f32 %v1367, 1.442695
    %v1370 = vpow.pop %v1369
    %v1371 = vmul.f32 %v1368, 1.442695
    %v1372 = vpow.pop %v1371
    %v1373 = vadd.f32 %v1370, 1.0
    %v1374 = vadd.f32 %v1372, 1.0
    %v1375 = vrcp.pop %v1373
    %v1376 = vmul.f32 %v1373, %v1375
    %v1377 = vsub.f32 1.0, %v1376
    %v1378 = vmul.f32 %v1375, %v1377
    %v1379 = vadd.f32 %v1375, %v1378
    %vm1380 = vweird.f32 %v1373
    %vm1381 = vweird.f32 %v1375
    %vm1382 = vmor %vm1380, %vm1381
    %v1383 = vsel %vm1382, %v1375, %v1379
    %v1384 = vand.u32 2147483647, %v1373
    %vm1385 = vcmp.eq.f32.partialorder %v1384, 8.507059e+37
    %v1386 = vand.u32 %v1373, 2147483648
    %v1387 = vor.u32 1.1754944e-38, %v1386
    %v1388 = vsel %vm1385, %v1387, %v1383
    %v1389 = vmul.f32 1.0, %v1388
    %v1390 = vrcp.pop %v1374
    %v1391 = vmul.f32 %v1374, %v1390
    %v1392 = vsub.f32 1.0, %v1391
    %v1393 = vmul.f32 %v1390, %v1392
    %v1394 = vadd.f32 %v1390, %v1393
    %vm1395 = vweird.f32 %v1374
    %vm1396 = vweird.f32 %v1390
    %vm1397 = vmor %vm1395, %vm1396
    %v1398 = vsel %vm1397, %v1390, %v1394
    %v1399 = vand.u32 2147483647, %v1374
    %vm1400 = vcmp.eq.f32.partialorder %v1399, 8.507059e+37
    %v1401 = vand.u32 %v1374, 2147483648
    %v1402 = vor.u32 1.1754944e-38, %v1401
    %v1403 = vsel %vm1400, %v1402, %v1398
    %v1404 = vmul.f32 1.0, %v1403
    %v1405 = vmul.f32 %v1349, %v1209
    %v1406 = vmul.f32 %v1364, %v1210
    %v1407 = vmul.f32 %v1311, %v1365
    %v1408 = vmul.f32 %v1326, %v1366
    %v1409 = vadd.f32 %v1405, %v1407
    %v1410 = vadd.f32 %v1406, %v1408
    %v1411 = vtanh.pop %v1409
    %v1412 = vtanh.pop %v1410
    %v1413 = vmul.f32 %v1389, %v1411
    %v1414 = vmul.f32 %v1404, %v1412
    %s1415 = scalar_lea.vmem [#allocation2], 256
    %v1416 = vld [vmem:[%s1415] sm:$0xff]
    %v1417 = vld [vmem:[%s1415 + $0x8] sm:$0xff]
    %v1418 = vld [vmem:[%s1415 + $0x10] sm:$0xff]
    %v1419 = vld [vmem:[%s1415 + $0x18] sm:$0xff]
    %v1420 = vld [vmem:[%s1415 + $0x20] sm:$0xff]
    %v1421 = vld [vmem:[%s1415 + $0x28] sm:$0xff]
    %v1422 = vld [vmem:[%s1415 + $0x30] sm:$0xff]
    %v1423 = vld [vmem:[%s1415 + $0x38] sm:$0xff]
    %v1424 = vpack.c.bf16 %v1414, %v1413
    %1425 = vmatpush.bf16.msra.mxu0 %v589
    %1426 = vmatpush.bf16.msra.mxu0 %v585
    %1427 = vmatpush.bf16.msra.mxu0 %v581
    %1428 = vmatpush.bf16.msra.mxu0 %v577
    %1429 = vmatpush.bf16.msra.mxu0 %v573
    %1430 = vmatpush.bf16.msra.mxu0 %v569
    %1431 = vmatpush.bf16.msra.mxu0 %v565
    %1432 = vmatpush.bf16.msra.mxu0 %v561
    %1433 = vmatmul.bf16.gmra.mxu0 %v1424
    %v1434 = vpop.f32.mrf.mxu0
    %v1435 = vadd.f32 0.0, %v1434
    %v1436 = vpop.f32.mrf.mxu0
    %v1437 = vadd.f32 0.0, %v1436
    %1438 = vdwg.mxu0
    %1439 = vmatpush.bf16.msra.mxu0 %v590
    %1440 = vmatpush.bf16.msra.mxu0 %v586
    %1441 = vmatpush.bf16.msra.mxu0 %v582
    %1442 = vmatpush.bf16.msra.mxu0 %v578
    %1443 = vmatpush.bf16.msra.mxu0 %v574
    %1444 = vmatpush.bf16.msra.mxu0 %v570
    %1445 = vmatpush.bf16.msra.mxu0 %v566
    %1446 = vmatpush.bf16.msra.mxu0 %v562
    %1447 = vmatmul.bf16.gmra.mxu0 %v1424
    %v1448 = vpop.f32.mrf.mxu0
    %v1449 = vadd.f32 0.0, %v1448
    %v1450 = vpop.f32.mrf.mxu0
    %v1451 = vadd.f32 0.0, %v1450
    %1452 = vdwg.mxu0
    %1453 = vmatpush.bf16.msra.mxu0 %v591
    %1454 = vmatpush.bf16.msra.mxu0 %v587
    %1455 = vmatpush.bf16.msra.mxu0 %v583
    %1456 = vmatpush.bf16.msra.mxu0 %v579
    %1457 = vmatpush.bf16.msra.mxu0 %v575
    %1458 = vmatpush.bf16.msra.mxu0 %v571
    %1459 = vmatpush.bf16.msra.mxu0 %v567
    %1460 = vmatpush.bf16.msra.mxu0 %v563
    %1461 = vmatmul.bf16.gmra.mxu0 %v1424
    %v1462 = vpop.f32.mrf.mxu0
    %v1463 = vadd.f32 0.0, %v1462
    %v1464 = vpop.f32.mrf.mxu0
    %v1465 = vadd.f32 0.0, %v1464
    %1466 = vdwg.mxu0
    %1467 = vmatpush.bf16.msra.mxu0 %v592
    %1468 = vmatpush.bf16.msra.mxu0 %v588
    %1469 = vmatpush.bf16.msra.mxu0 %v584
    %1470 = vmatpush.bf16.msra.mxu0 %v580
    %1471 = vmatpush.bf16.msra.mxu0 %v576
    %1472 = vmatpush.bf16.msra.mxu0 %v572
    %1473 = vmatpush.bf16.msra.mxu0 %v568
    %1474 = vmatpush.bf16.msra.mxu0 %v564
    %1475 = vmatmul.bf16.gmra.mxu0 %v1424
    %v1476 = vpop.f32.mrf.mxu0
    %v1477 = vadd.f32 0.0, %v1476
    %v1478 = vpop.f32.mrf.mxu0
    %v1479 = vadd.f32 0.0, %v1478
    %1480 = vdwg.mxu0
    %v1481 = vadd.f32 %v1416, %v1435
    %v1482 = vadd.f32 %v1417, %v1449
    %v1483 = vadd.f32 %v1418, %v1463
    %v1484 = vadd.f32 %v1419, %v1477
    %v1485 = vadd.f32 %v1420, %v1437
    %v1486 = vadd.f32 %v1421, %v1451
    %v1487 = vadd.f32 %v1422, %v1465
    %v1488 = vadd.f32 %v1423, %v1479
    %v1489 = vxor.u32 %v1481, 2147483648
    %v1490 = vxor.u32 %v1485, 2147483648
    %v1491 = vmul.f32 %v1489, 1.442695
    %v1492 = vpow.pop %v1491
    %v1493 = vmul.f32 %v1490, 1.442695
    %v1494 = vpow.pop %v1493
    %v1495 = vadd.f32 %v1492, 1.0
    %v1496 = vadd.f32 %v1494, 1.0
    %v1497 = vrcp.pop %v1495
    %v1498 = vmul.f32 %v1495, %v1497
    %v1499 = vsub.f32 1.0, %v1498
    %v1500 = vmul.f32 %v1497, %v1499
    %v1501 = vadd.f32 %v1497, %v1500
    %vm1502 = vweird.f32 %v1495
    %vm1503 = vweird.f32 %v1497
    %vm1504 = vmor %vm1502, %vm1503
    %v1505 = vsel %vm1504, %v1497, %v1501
    %v1506 = vand.u32 2147483647, %v1495
    %vm1507 = vcmp.eq.f32.partialorder %v1506, 8.507059e+37
    %v1508 = vand.u32 %v1495, 2147483648
    %v1509 = vor.u32 1.1754944e-38, %v1508
    %v1510 = vsel %vm1507, %v1509, %v1505
    %v1511 = vmul.f32 1.0, %v1510
    %v1512 = vrcp.pop %v1496
    %v1513 = vmul.f32 %v1496, %v1512
    %v1514 = vsub.f32 1.0, %v1513
    %v1515 = vmul.f32 %v1512, %v1514
    %v1516 = vadd.f32 %v1512, %v1515
    %vm1517 = vweird.f32 %v1496
    %vm1518 = vweird.f32 %v1512
    %vm1519 = vmor %vm1517, %vm1518
    %v1520 = vsel %vm1519, %v1512, %v1516
    %v1521 = vand.u32 2147483647, %v1496
    %vm1522 = vcmp.eq.f32.partialorder %v1521, 8.507059e+37
    %v1523 = vand.u32 %v1496, 2147483648
    %v1524 = vor.u32 1.1754944e-38, %v1523
    %v1525 = vsel %vm1522, %v1524, %v1520
    %v1526 = vmul.f32 1.0, %v1525
    %v1527 = vxor.u32 %v1482, 2147483648
    %v1528 = vxor.u32 %v1486, 2147483648
    %v1529 = vmul.f32 %v1527, 1.442695
    %v1530 = vpow.pop %v1529
    %v1531 = vmul.f32 %v1528, 1.442695
    %v1532 = vpow.pop %v1531
    %v1533 = vadd.f32 %v1530, 1.0
    %v1534 = vadd.f32 %v1532, 1.0
    %v1535 = vrcp.pop %v1533
    %v1536 = vmul.f32 %v1533, %v1535
    %v1537 = vsub.f32 1.0, %v1536
    %v1538 = vmul.f32 %v1535, %v1537
    %v1539 = vadd.f32 %v1535, %v1538
    %vm1540 = vweird.f32 %v1533
    %vm1541 = vweird.f32 %v1535
    %vm1542 = vmor %vm1540, %vm1541
    %v1543 = vsel %vm1542, %v1535, %v1539
    %v1544 = vand.u32 2147483647, %v1533
    %vm1545 = vcmp.eq.f32.partialorder %v1544, 8.507059e+37
    %v1546 = vand.u32 %v1533, 2147483648
    %v1547 = vor.u32 1.1754944e-38, %v1546
    %v1548 = vsel %vm1545, %v1547, %v1543
    %v1549 = vmul.f32 1.0, %v1548
    %v1550 = vrcp.pop %v1534
    %v1551 = vmul.f32 %v1534, %v1550
    %v1552 = vsub.f32 1.0, %v1551
    %v1553 = vmul.f32 %v1550, %v1552
    %v1554 = vadd.f32 %v1550, %v1553
    %vm1555 = vweird.f32 %v1534
    %vm1556 = vweird.f32 %v1550
    %vm1557 = vmor %vm1555, %vm1556
    %v1558 = vsel %vm1557, %v1550, %v1554
    %v1559 = vand.u32 2147483647, %v1534
    %vm1560 = vcmp.eq.f32.partialorder %v1559, 8.507059e+37
    %v1561 = vand.u32 %v1534, 2147483648
    %v1562 = vor.u32 1.1754944e-38, %v1561
    %v1563 = vsel %vm1560, %v1562, %v1558
    %v1564 = vmul.f32 1.0, %v1563
    %v1565 = vtanh.pop %v1483
    %v1566 = vtanh.pop %v1487
    %v1567 = vxor.u32 %v1484, 2147483648
    %v1568 = vxor.u32 %v1488, 2147483648
    %v1569 = vmul.f32 %v1567, 1.442695
    %v1570 = vpow.pop %v1569
    %v1571 = vmul.f32 %v1568, 1.442695
    %v1572 = vpow.pop %v1571
    %v1573 = vadd.f32 %v1570, 1.0
    %v1574 = vadd.f32 %v1572, 1.0
    %v1575 = vrcp.pop %v1573
    %v1576 = vmul.f32 %v1573, %v1575
    %v1577 = vsub.f32 1.0, %v1576
    %v1578 = vmul.f32 %v1575, %v1577
    %v1579 = vadd.f32 %v1575, %v1578
    %vm1580 = vweird.f32 %v1573
    %vm1581 = vweird.f32 %v1575
    %vm1582 = vmor %vm1580, %vm1581
    %v1583 = vsel %vm1582, %v1575, %v1579
    %v1584 = vand.u32 2147483647, %v1573
    %vm1585 = vcmp.eq.f32.partialorder %v1584, 8.507059e+37
    %v1586 = vand.u32 %v1573, 2147483648
    %v1587 = vor.u32 1.1754944e-38, %v1586
    %v1588 = vsel %vm1585, %v1587, %v1583
    %v1589 = vmul.f32 1.0, %v1588
    %v1590 = vrcp.pop %v1574
    %v1591 = vmul.f32 %v1574, %v1590
    %v1592 = vsub.f32 1.0, %v1591
    %v1593 = vmul.f32 %v1590, %v1592
    %v1594 = vadd.f32 %v1590, %v1593
    %vm1595 = vweird.f32 %v1574
    %vm1596 = vweird.f32 %v1590
    %vm1597 = vmor %vm1595, %vm1596
    %v1598 = vsel %vm1597, %v1590, %v1594
    %v1599 = vand.u32 2147483647, %v1574
    %vm1600 = vcmp.eq.f32.partialorder %v1599, 8.507059e+37
    %v1601 = vand.u32 %v1574, 2147483648
    %v1602 = vor.u32 1.1754944e-38, %v1601
    %v1603 = vsel %vm1600, %v1602, %v1598
    %v1604 = vmul.f32 1.0, %v1603
    %v1605 = vmul.f32 %v1549, %v1409
    %v1606 = vmul.f32 %v1564, %v1410
    %v1607 = vmul.f32 %v1511, %v1565
    %v1608 = vmul.f32 %v1526, %v1566
    %v1609 = vadd.f32 %v1605, %v1607
    %v1610 = vadd.f32 %v1606, %v1608
    %v1611 = vtanh.pop %v1609
    %v1612 = vtanh.pop %v1610
    %v1613 = vmul.f32 %v1589, %v1611
    %v1614 = vmul.f32 %v1604, %v1612
    %s1615 = scalar_lea.vmem [#allocation2], 320
    %v1616 = vld [vmem:[%s1615] sm:$0xff]
    %v1617 = vld [vmem:[%s1615 + $0x8] sm:$0xff]
    %v1618 = vld [vmem:[%s1615 + $0x10] sm:$0xff]
    %v1619 = vld [vmem:[%s1615 + $0x18] sm:$0xff]
    %v1620 = vld [vmem:[%s1615 + $0x20] sm:$0xff]
    %v1621 = vld [vmem:[%s1615 + $0x28] sm:$0xff]
    %v1622 = vld [vmem:[%s1615 + $0x30] sm:$0xff]
    %v1623 = vld [vmem:[%s1615 + $0x38] sm:$0xff]
    %v1624 = vpack.c.bf16 %v1614, %v1613
    %1625 = vmatpush.bf16.msra.mxu0 %v589
    %1626 = vmatpush.bf16.msra.mxu0 %v585
    %1627 = vmatpush.bf16.msra.mxu0 %v581
    %1628 = vmatpush.bf16.msra.mxu0 %v577
    %1629 = vmatpush.bf16.msra.mxu0 %v573
    %1630 = vmatpush.bf16.msra.mxu0 %v569
    %1631 = vmatpush.bf16.msra.mxu0 %v565
    %1632 = vmatpush.bf16.msra.mxu0 %v561
    %1633 = vmatmul.bf16.gmra.mxu0 %v1624
    %v1634 = vpop.f32.mrf.mxu0
    %v1635 = vadd.f32 0.0, %v1634
    %v1636 = vpop.f32.mrf.mxu0
    %v1637 = vadd.f32 0.0, %v1636
    %1638 = vdwg.mxu0
    %1639 = vmatpush.bf16.msra.mxu0 %v590
    %1640 = vmatpush.bf16.msra.mxu0 %v586
    %1641 = vmatpush.bf16.msra.mxu0 %v582
    %1642 = vmatpush.bf16.msra.mxu0 %v578
    %1643 = vmatpush.bf16.msra.mxu0 %v574
    %1644 = vmatpush.bf16.msra.mxu0 %v570
    %1645 = vmatpush.bf16.msra.mxu0 %v566
    %1646 = vmatpush.bf16.msra.mxu0 %v562
    %1647 = vmatmul.bf16.gmra.mxu0 %v1624
    %v1648 = vpop.f32.mrf.mxu0
    %v1649 = vadd.f32 0.0, %v1648
    %v1650 = vpop.f32.mrf.mxu0
    %v1651 = vadd.f32 0.0, %v1650
    %1652 = vdwg.mxu0
    %1653 = vmatpush.bf16.msra.mxu0 %v591
    %1654 = vmatpush.bf16.msra.mxu0 %v587
    %1655 = vmatpush.bf16.msra.mxu0 %v583
    %1656 = vmatpush.bf16.msra.mxu0 %v579
    %1657 = vmatpush.bf16.msra.mxu0 %v575
    %1658 = vmatpush.bf16.msra.mxu0 %v571
    %1659 = vmatpush.bf16.msra.mxu0 %v567
    %1660 = vmatpush.bf16.msra.mxu0 %v563
    %1661 = vmatmul.bf16.gmra.mxu0 %v1624
    %v1662 = vpop.f32.mrf.mxu0
    %v1663 = vadd.f32 0.0, %v1662
    %v1664 = vpop.f32.mrf.mxu0
    %v1665 = vadd.f32 0.0, %v1664
    %1666 = vdwg.mxu0
    %1667 = vmatpush.bf16.msra.mxu0 %v592
    %1668 = vmatpush.bf16.msra.mxu0 %v588
    %1669 = vmatpush.bf16.msra.mxu0 %v584
    %1670 = vmatpush.bf16.msra.mxu0 %v580
    %1671 = vmatpush.bf16.msra.mxu0 %v576
    %1672 = vmatpush.bf16.msra.mxu0 %v572
    %1673 = vmatpush.bf16.msra.mxu0 %v568
    %1674 = vmatpush.bf16.msra.mxu0 %v564
    %1675 = vmatmul.bf16.gmra.mxu0 %v1624
    %v1676 = vpop.f32.mrf.mxu0
    %v1677 = vadd.f32 0.0, %v1676
    %v1678 = vpop.f32.mrf.mxu0
    %v1679 = vadd.f32 0.0, %v1678
    %1680 = vdwg.mxu0
    %v1681 = vadd.f32 %v1616, %v1635
    %v1682 = vadd.f32 %v1617, %v1649
    %v1683 = vadd.f32 %v1618, %v1663
    %v1684 = vadd.f32 %v1619, %v1677
    %v1685 = vadd.f32 %v1620, %v1637
    %v1686 = vadd.f32 %v1621, %v1651
    %v1687 = vadd.f32 %v1622, %v1665
    %v1688 = vadd.f32 %v1623, %v1679
    %v1689 = vxor.u32 %v1681, 2147483648
    %v1690 = vxor.u32 %v1685, 2147483648
    %v1691 = vmul.f32 %v1689, 1.442695
    %v1692 = vpow.pop %v1691
    %v1693 = vmul.f32 %v1690, 1.442695
    %v1694 = vpow.pop %v1693
    %v1695 = vadd.f32 %v1692, 1.0
    %v1696 = vadd.f32 %v1694, 1.0
    %v1697 = vrcp.pop %v1695
    %v1698 = vmul.f32 %v1695, %v1697
    %v1699 = vsub.f32 1.0, %v1698
    %v1700 = vmul.f32 %v1697, %v1699
    %v1701 = vadd.f32 %v1697, %v1700
    %vm1702 = vweird.f32 %v1695
    %vm1703 = vweird.f32 %v1697
    %vm1704 = vmor %vm1702, %vm1703
    %v1705 = vsel %vm1704, %v1697, %v1701
    %v1706 = vand.u32 2147483647, %v1695
    %vm1707 = vcmp.eq.f32.partialorder %v1706, 8.507059e+37
    %v1708 = vand.u32 %v1695, 2147483648
    %v1709 = vor.u32 1.1754944e-38, %v1708
    %v1710 = vsel %vm1707, %v1709, %v1705
    %v1711 = vmul.f32 1.0, %v1710
    %v1712 = vrcp.pop %v1696
    %v1713 = vmul.f32 %v1696, %v1712
    %v1714 = vsub.f32 1.0, %v1713
    %v1715 = vmul.f32 %v1712, %v1714
    %v1716 = vadd.f32 %v1712, %v1715
    %vm1717 = vweird.f32 %v1696
    %vm1718 = vweird.f32 %v1712
    %vm1719 = vmor %vm1717, %vm1718
    %v1720 = vsel %vm1719, %v1712, %v1716
    %v1721 = vand.u32 2147483647, %v1696
    %vm1722 = vcmp.eq.f32.partialorder %v1721, 8.507059e+37
    %v1723 = vand.u32 %v1696, 2147483648
    %v1724 = vor.u32 1.1754944e-38, %v1723
    %v1725 = vsel %vm1722, %v1724, %v1720
    %v1726 = vmul.f32 1.0, %v1725
    %v1727 = vxor.u32 %v1682, 2147483648
    %v1728 = vxor.u32 %v1686, 2147483648
    %v1729 = vmul.f32 %v1727, 1.442695
    %v1730 = vpow.pop %v1729
    %v1731 = vmul.f32 %v1728, 1.442695
    %v1732 = vpow.pop %v1731
    %v1733 = vadd.f32 %v1730, 1.0
    %v1734 = vadd.f32 %v1732, 1.0
    %v1735 = vrcp.pop %v1733
    %v1736 = vmul.f32 %v1733, %v1735
    %v1737 = vsub.f32 1.0, %v1736
    %v1738 = vmul.f32 %v1735, %v1737
    %v1739 = vadd.f32 %v1735, %v1738
    %vm1740 = vweird.f32 %v1733
    %vm1741 = vweird.f32 %v1735
    %vm1742 = vmor %vm1740, %vm1741
    %v1743 = vsel %vm1742, %v1735, %v1739
    %v1744 = vand.u32 2147483647, %v1733
    %vm1745 = vcmp.eq.f32.partialorder %v1744, 8.507059e+37
    %v1746 = vand.u32 %v1733, 2147483648
    %v1747 = vor.u32 1.1754944e-38, %v1746
    %v1748 = vsel %vm1745, %v1747, %v1743
    %v1749 = vmul.f32 1.0, %v1748
    %v1750 = vrcp.pop %v1734
    %v1751 = vmul.f32 %v1734, %v1750
    %v1752 = vsub.f32 1.0, %v1751
    %v1753 = vmul.f32 %v1750, %v1752
    %v1754 = vadd.f32 %v1750, %v1753
    %vm1755 = vweird.f32 %v1734
    %vm1756 = vweird.f32 %v1750
    %vm1757 = vmor %vm1755, %vm1756
    %v1758 = vsel %vm1757, %v1750, %v1754
    %v1759 = vand.u32 2147483647, %v1734
    %vm1760 = vcmp.eq.f32.partialorder %v1759, 8.507059e+37
    %v1761 = vand.u32 %v1734, 2147483648
    %v1762 = vor.u32 1.1754944e-38, %v1761
    %v1763 = vsel %vm1760, %v1762, %v1758
    %v1764 = vmul.f32 1.0, %v1763
    %v1765 = vtanh.pop %v1683
    %v1766 = vtanh.pop %v1687
    %v1767 = vxor.u32 %v1684, 2147483648
    %v1768 = vxor.u32 %v1688, 2147483648
    %v1769 = vmul.f32 %v1767, 1.442695
    %v1770 = vpow.pop %v1769
    %v1771 = vmul.f32 %v1768, 1.442695
    %v1772 = vpow.pop %v1771
    %v1773 = vadd.f32 %v1770, 1.0
    %v1774 = vadd.f32 %v1772, 1.0
    %v1775 = vrcp.pop %v1773
    %v1776 = vmul.f32 %v1773, %v1775
    %v1777 = vsub.f32 1.0, %v1776
    %v1778 = vmul.f32 %v1775, %v1777
    %v1779 = vadd.f32 %v1775, %v1778
    %vm1780 = vweird.f32 %v1773
    %vm1781 = vweird.f32 %v1775
    %vm1782 = vmor %vm1780, %vm1781
    %v1783 = vsel %vm1782, %v1775, %v1779
    %v1784 = vand.u32 2147483647, %v1773
    %vm1785 = vcmp.eq.f32.partialorder %v1784, 8.507059e+37
    %v1786 = vand.u32 %v1773, 2147483648
    %v1787 = vor.u32 1.1754944e-38, %v1786
    %v1788 = vsel %vm1785, %v1787, %v1783
    %v1789 = vmul.f32 1.0, %v1788
    %v1790 = vrcp.pop %v1774
    %v1791 = vmul.f32 %v1774, %v1790
    %v1792 = vsub.f32 1.0, %v1791
    %v1793 = vmul.f32 %v1790, %v1792
    %v1794 = vadd.f32 %v1790, %v1793
    %vm1795 = vweird.f32 %v1774
    %vm1796 = vweird.f32 %v1790
    %vm1797 = vmor %vm1795, %vm1796
    %v1798 = vsel %vm1797, %v1790, %v1794
    %v1799 = vand.u32 2147483647, %v1774
    %vm1800 = vcmp.eq.f32.partialorder %v1799, 8.507059e+37
    %v1801 = vand.u32 %v1774, 2147483648
    %v1802 = vor.u32 1.1754944e-38, %v1801
    %v1803 = vsel %vm1800, %v1802, %v1798
    %v1804 = vmul.f32 1.0, %v1803
    %v1805 = vmul.f32 %v1749, %v1609
    %v1806 = vmul.f32 %v1764, %v1610
    %v1807 = vmul.f32 %v1711, %v1765
    %v1808 = vmul.f32 %v1726, %v1766
    %v1809 = vadd.f32 %v1805, %v1807
    %v1810 = vadd.f32 %v1806, %v1808
    %v1811 = vtanh.pop %v1809
    %v1812 = vtanh.pop %v1810
    %v1813 = vmul.f32 %v1789, %v1811
    %v1814 = vmul.f32 %v1804, %v1812
    %s1815 = scalar_lea.vmem [#allocation2], 384
    %v1816 = vld [vmem:[%s1815] sm:$0xff]
    %v1817 = vld [vmem:[%s1815 + $0x8] sm:$0xff]
    %v1818 = vld [vmem:[%s1815 + $0x10] sm:$0xff]
    %v1819 = vld [vmem:[%s1815 + $0x18] sm:$0xff]
    %v1820 = vld [vmem:[%s1815 + $0x20] sm:$0xff]
    %v1821 = vld [vmem:[%s1815 + $0x28] sm:$0xff]
    %v1822 = vld [vmem:[%s1815 + $0x30] sm:$0xff]
    %v1823 = vld [vmem:[%s1815 + $0x38] sm:$0xff]
    %v1824 = vpack.c.bf16 %v1814, %v1813
    %1825 = vmatpush.bf16.msra.mxu0 %v589
    %1826 = vmatpush.bf16.msra.mxu0 %v585
    %1827 = vmatpush.bf16.msra.mxu0 %v581
    %1828 = vmatpush.bf16.msra.mxu0 %v577
    %1829 = vmatpush.bf16.msra.mxu0 %v573
    %1830 = vmatpush.bf16.msra.mxu0 %v569
    %1831 = vmatpush.bf16.msra.mxu0 %v565
    %1832 = vmatpush.bf16.msra.mxu0 %v561
    %1833 = vmatmul.bf16.gmra.mxu0 %v1824
    %v1834 = vpop.f32.mrf.mxu0
    %v1835 = vadd.f32 0.0, %v1834
    %v1836 = vpop.f32.mrf.mxu0
    %v1837 = vadd.f32 0.0, %v1836
    %1838 = vdwg.mxu0
    %1839 = vmatpush.bf16.msra.mxu0 %v590
    %1840 = vmatpush.bf16.msra.mxu0 %v586
    %1841 = vmatpush.bf16.msra.mxu0 %v582
    %1842 = vmatpush.bf16.msra.mxu0 %v578
    %1843 = vmatpush.bf16.msra.mxu0 %v574
    %1844 = vmatpush.bf16.msra.mxu0 %v570
    %1845 = vmatpush.bf16.msra.mxu0 %v566
    %1846 = vmatpush.bf16.msra.mxu0 %v562
    %1847 = vmatmul.bf16.gmra.mxu0 %v1824
    %v1848 = vpop.f32.mrf.mxu0
    %v1849 = vadd.f32 0.0, %v1848
    %v1850 = vpop.f32.mrf.mxu0
    %v1851 = vadd.f32 0.0, %v1850
    %1852 = vdwg.mxu0
    %1853 = vmatpush.bf16.msra.mxu0 %v591
    %1854 = vmatpush.bf16.msra.mxu0 %v587
    %1855 = vmatpush.bf16.msra.mxu0 %v583
    %1856 = vmatpush.bf16.msra.mxu0 %v579
    %1857 = vmatpush.bf16.msra.mxu0 %v575
    %1858 = vmatpush.bf16.msra.mxu0 %v571
    %1859 = vmatpush.bf16.msra.mxu0 %v567
    %1860 = vmatpush.bf16.msra.mxu0 %v563
    %1861 = vmatmul.bf16.gmra.mxu0 %v1824
    %v1862 = vpop.f32.mrf.mxu0
    %v1863 = vadd.f32 0.0, %v1862
    %v1864 = vpop.f32.mrf.mxu0
    %v1865 = vadd.f32 0.0, %v1864
    %1866 = vdwg.mxu0
    %1867 = vmatpush.bf16.msra.mxu0 %v592
    %1868 = vmatpush.bf16.msra.mxu0 %v588
    %1869 = vmatpush.bf16.msra.mxu0 %v584
    %1870 = vmatpush.bf16.msra.mxu0 %v580
    %1871 = vmatpush.bf16.msra.mxu0 %v576
    %1872 = vmatpush.bf16.msra.mxu0 %v572
    %1873 = vmatpush.bf16.msra.mxu0 %v568
    %1874 = vmatpush.bf16.msra.mxu0 %v564
    %1875 = vmatmul.bf16.gmra.mxu0 %v1824
    %v1876 = vpop.f32.mrf.mxu0
    %v1877 = vadd.f32 0.0, %v1876
    %v1878 = vpop.f32.mrf.mxu0
    %v1879 = vadd.f32 0.0, %v1878
    %1880 = vdwg.mxu0
    %v1881 = vadd.f32 %v1816, %v1835
    %v1882 = vadd.f32 %v1817, %v1849
    %v1883 = vadd.f32 %v1818, %v1863
    %v1884 = vadd.f32 %v1819, %v1877
    %v1885 = vadd.f32 %v1820, %v1837
    %v1886 = vadd.f32 %v1821, %v1851
    %v1887 = vadd.f32 %v1822, %v1865
    %v1888 = vadd.f32 %v1823, %v1879
    %v1889 = vxor.u32 %v1881, 2147483648
    %v1890 = vxor.u32 %v1885, 2147483648
    %v1891 = vmul.f32 %v1889, 1.442695
    %v1892 = vpow.pop %v1891
    %v1893 = vmul.f32 %v1890, 1.442695
    %v1894 = vpow.pop %v1893
    %v1895 = vadd.f32 %v1892, 1.0
    %v1896 = vadd.f32 %v1894, 1.0
    %v1897 = vrcp.pop %v1895
    %v1898 = vmul.f32 %v1895, %v1897
    %v1899 = vsub.f32 1.0, %v1898
    %v1900 = vmul.f32 %v1897, %v1899
    %v1901 = vadd.f32 %v1897, %v1900
    %vm1902 = vweird.f32 %v1895
    %vm1903 = vweird.f32 %v1897
    %vm1904 = vmor %vm1902, %vm1903
    %v1905 = vsel %vm1904, %v1897, %v1901
    %v1906 = vand.u32 2147483647, %v1895
    %vm1907 = vcmp.eq.f32.partialorder %v1906, 8.507059e+37
    %v1908 = vand.u32 %v1895, 2147483648
    %v1909 = vor.u32 1.1754944e-38, %v1908
    %v1910 = vsel %vm1907, %v1909, %v1905
    %v1911 = vmul.f32 1.0, %v1910
    %v1912 = vrcp.pop %v1896
    %v1913 = vmul.f32 %v1896, %v1912
    %v1914 = vsub.f32 1.0, %v1913
    %v1915 = vmul.f32 %v1912, %v1914
    %v1916 = vadd.f32 %v1912, %v1915
    %vm1917 = vweird.f32 %v1896
    %vm1918 = vweird.f32 %v1912
    %vm1919 = vmor %vm1917, %vm1918
    %v1920 = vsel %vm1919, %v1912, %v1916
    %v1921 = vand.u32 2147483647, %v1896
    %vm1922 = vcmp.eq.f32.partialorder %v1921, 8.507059e+37
    %v1923 = vand.u32 %v1896, 2147483648
    %v1924 = vor.u32 1.1754944e-38, %v1923
    %v1925 = vsel %vm1922, %v1924, %v1920
    %v1926 = vmul.f32 1.0, %v1925
    %v1927 = vxor.u32 %v1882, 2147483648
    %v1928 = vxor.u32 %v1886, 2147483648
    %v1929 = vmul.f32 %v1927, 1.442695
    %v1930 = vpow.pop %v1929
    %v1931 = vmul.f32 %v1928, 1.442695
    %v1932 = vpow.pop %v1931
    %v1933 = vadd.f32 %v1930, 1.0
    %v1934 = vadd.f32 %v1932, 1.0
    %v1935 = vrcp.pop %v1933
    %v1936 = vmul.f32 %v1933, %v1935
    %v1937 = vsub.f32 1.0, %v1936
    %v1938 = vmul.f32 %v1935, %v1937
    %v1939 = vadd.f32 %v1935, %v1938
    %vm1940 = vweird.f32 %v1933
    %vm1941 = vweird.f32 %v1935
    %vm1942 = vmor %vm1940, %vm1941
    %v1943 = vsel %vm1942, %v1935, %v1939
    %v1944 = vand.u32 2147483647, %v1933
    %vm1945 = vcmp.eq.f32.partialorder %v1944, 8.507059e+37
    %v1946 = vand.u32 %v1933, 2147483648
    %v1947 = vor.u32 1.1754944e-38, %v1946
    %v1948 = vsel %vm1945, %v1947, %v1943
    %v1949 = vmul.f32 1.0, %v1948
    %v1950 = vrcp.pop %v1934
    %v1951 = vmul.f32 %v1934, %v1950
    %v1952 = vsub.f32 1.0, %v1951
    %v1953 = vmul.f32 %v1950, %v1952
    %v1954 = vadd.f32 %v1950, %v1953
    %vm1955 = vweird.f32 %v1934
    %vm1956 = vweird.f32 %v1950
    %vm1957 = vmor %vm1955, %vm1956
    %v1958 = vsel %vm1957, %v1950, %v1954
    %v1959 = vand.u32 2147483647, %v1934
    %vm1960 = vcmp.eq.f32.partialorder %v1959, 8.507059e+37
    %v1961 = vand.u32 %v1934, 2147483648
    %v1962 = vor.u32 1.1754944e-38, %v1961
    %v1963 = vsel %vm1960, %v1962, %v1958
    %v1964 = vmul.f32 1.0, %v1963
    %v1965 = vtanh.pop %v1883
    %v1966 = vtanh.pop %v1887
    %v1967 = vxor.u32 %v1884, 2147483648
    %v1968 = vxor.u32 %v1888, 2147483648
    %v1969 = vmul.f32 %v1967, 1.442695
    %v1970 = vpow.pop %v1969
    %v1971 = vmul.f32 %v1968, 1.442695
    %v1972 = vpow.pop %v1971
    %v1973 = vadd.f32 %v1970, 1.0
    %v1974 = vadd.f32 %v1972, 1.0
    %v1975 = vrcp.pop %v1973
    %v1976 = vmul.f32 %v1973, %v1975
    %v1977 = vsub.f32 1.0, %v1976
    %v1978 = vmul.f32 %v1975, %v1977
    %v1979 = vadd.f32 %v1975, %v1978
    %vm1980 = vweird.f32 %v1973
    %vm1981 = vweird.f32 %v1975
    %vm1982 = vmor %vm1980, %vm1981
    %v1983 = vsel %vm1982, %v1975, %v1979
    %v1984 = vand.u32 2147483647, %v1973
    %vm1985 = vcmp.eq.f32.partialorder %v1984, 8.507059e+37
    %v1986 = vand.u32 %v1973, 2147483648
    %v1987 = vor.u32 1.1754944e-38, %v1986
    %v1988 = vsel %vm1985, %v1987, %v1983
    %v1989 = vmul.f32 1.0, %v1988
    %v1990 = vrcp.pop %v1974
    %v1991 = vmul.f32 %v1974, %v1990
    %v1992 = vsub.f32 1.0, %v1991
    %v1993 = vmul.f32 %v1990, %v1992
    %v1994 = vadd.f32 %v1990, %v1993
    %vm1995 = vweird.f32 %v1974
    %vm1996 = vweird.f32 %v1990
    %vm1997 = vmor %vm1995, %vm1996
    %v1998 = vsel %vm1997, %v1990, %v1994
    %v1999 = vand.u32 2147483647, %v1974
    %vm2000 = vcmp.eq.f32.partialorder %v1999, 8.507059e+37
    %v2001 = vand.u32 %v1974, 2147483648
    %v2002 = vor.u32 1.1754944e-38, %v2001
    %v2003 = vsel %vm2000, %v2002, %v1998
    %v2004 = vmul.f32 1.0, %v2003
    %v2005 = vmul.f32 %v1949, %v1809
    %v2006 = vmul.f32 %v1964, %v1810
    %v2007 = vmul.f32 %v1911, %v1965
    %v2008 = vmul.f32 %v1926, %v1966
    %v2009 = vadd.f32 %v2005, %v2007
    %v2010 = vadd.f32 %v2006, %v2008
    %v2011 = vtanh.pop %v2009
    %v2012 = vtanh.pop %v2010
    %v2013 = vmul.f32 %v1989, %v2011
    %v2014 = vmul.f32 %v2004, %v2012
    %s2015 = scalar_lea.vmem [#allocation2], 448
    %v2016 = vld [vmem:[%s2015] sm:$0xff]
    %v2017 = vld [vmem:[%s2015 + $0x8] sm:$0xff]
    %v2018 = vld [vmem:[%s2015 + $0x10] sm:$0xff]
    %v2019 = vld [vmem:[%s2015 + $0x18] sm:$0xff]
    %v2020 = vld [vmem:[%s2015 + $0x20] sm:$0xff]
    %v2021 = vld [vmem:[%s2015 + $0x28] sm:$0xff]
    %v2022 = vld [vmem:[%s2015 + $0x30] sm:$0xff]
    %v2023 = vld [vmem:[%s2015 + $0x38] sm:$0xff]
    %v2024 = vpack.c.bf16 %v2014, %v2013
    %2025 = vmatpush.bf16.msra.mxu0 %v589
    %2026 = vmatpush.bf16.msra.mxu0 %v585
    %2027 = vmatpush.bf16.msra.mxu0 %v581
    %2028 = vmatpush.bf16.msra.mxu0 %v577
    %2029 = vmatpush.bf16.msra.mxu0 %v573
    %2030 = vmatpush.bf16.msra.mxu0 %v569
    %2031 = vmatpush.bf16.msra.mxu0 %v565
    %2032 = vmatpush.bf16.msra.mxu0 %v561
    %2033 = vmatmul.bf16.gmra.mxu0 %v2024
    %v2034 = vpop.f32.mrf.mxu0
    %v2035 = vadd.f32 0.0, %v2034
    %v2036 = vpop.f32.mrf.mxu0
    %v2037 = vadd.f32 0.0, %v2036
    %2038 = vdwg.mxu0
    %2039 = vmatpush.bf16.msra.mxu0 %v590
    %2040 = vmatpush.bf16.msra.mxu0 %v586
    %2041 = vmatpush.bf16.msra.mxu0 %v582
    %2042 = vmatpush.bf16.msra.mxu0 %v578
    %2043 = vmatpush.bf16.msra.mxu0 %v574
    %2044 = vmatpush.bf16.msra.mxu0 %v570
    %2045 = vmatpush.bf16.msra.mxu0 %v566
    %2046 = vmatpush.bf16.msra.mxu0 %v562
    %2047 = vmatmul.bf16.gmra.mxu0 %v2024
    %v2048 = vpop.f32.mrf.mxu0
    %v2049 = vadd.f32 0.0, %v2048
    %v2050 = vpop.f32.mrf.mxu0
    %v2051 = vadd.f32 0.0, %v2050
    %2052 = vdwg.mxu0
    %2053 = vmatpush.bf16.msra.mxu0 %v591
    %2054 = vmatpush.bf16.msra.mxu0 %v587
    %2055 = vmatpush.bf16.msra.mxu0 %v583
    %2056 = vmatpush.bf16.msra.mxu0 %v579
    %2057 = vmatpush.bf16.msra.mxu0 %v575
    %2058 = vmatpush.bf16.msra.mxu0 %v571
    %2059 = vmatpush.bf16.msra.mxu0 %v567
    %2060 = vmatpush.bf16.msra.mxu0 %v563
    %2061 = vmatmul.bf16.gmra.mxu0 %v2024
    %v2062 = vpop.f32.mrf.mxu0
    %v2063 = vadd.f32 0.0, %v2062
    %v2064 = vpop.f32.mrf.mxu0
    %v2065 = vadd.f32 0.0, %v2064
    %2066 = vdwg.mxu0
    %2067 = vmatpush.bf16.msra.mxu0 %v592
    %2068 = vmatpush.bf16.msra.mxu0 %v588
    %2069 = vmatpush.bf16.msra.mxu0 %v584
    %2070 = vmatpush.bf16.msra.mxu0 %v580
    %2071 = vmatpush.bf16.msra.mxu0 %v576
    %2072 = vmatpush.bf16.msra.mxu0 %v572
    %2073 = vmatpush.bf16.msra.mxu0 %v568
    %2074 = vmatpush.bf16.msra.mxu0 %v564
    %2075 = vmatmul.bf16.gmra.mxu0 %v2024
    %v2076 = vpop.f32.mrf.mxu0
    %v2077 = vadd.f32 0.0, %v2076
    %v2078 = vpop.f32.mrf.mxu0
    %v2079 = vadd.f32 0.0, %v2078
    %2080 = vdwg.mxu0
    %v2081 = vadd.f32 %v2016, %v2035
    %v2082 = vadd.f32 %v2017, %v2049
    %v2083 = vadd.f32 %v2018, %v2063
    %v2084 = vadd.f32 %v2019, %v2077
    %v2085 = vadd.f32 %v2020, %v2037
    %v2086 = vadd.f32 %v2021, %v2051
    %v2087 = vadd.f32 %v2022, %v2065
    %v2088 = vadd.f32 %v2023, %v2079
    %v2089 = vxor.u32 %v2081, 2147483648
    %v2090 = vxor.u32 %v2085, 2147483648
    %v2091 = vmul.f32 %v2089, 1.442695
    %v2092 = vpow.pop %v2091
    %v2093 = vmul.f32 %v2090, 1.442695
    %v2094 = vpow.pop %v2093
    %v2095 = vadd.f32 %v2092, 1.0
    %v2096 = vadd.f32 %v2094, 1.0
    %v2097 = vrcp.pop %v2095
    %v2098 = vmul.f32 %v2095, %v2097
    %v2099 = vsub.f32 1.0, %v2098
    %v2100 = vmul.f32 %v2097, %v2099
    %v2101 = vadd.f32 %v2097, %v2100
    %vm2102 = vweird.f32 %v2095
    %vm2103 = vweird.f32 %v2097
    %vm2104 = vmor %vm2102, %vm2103
    %v2105 = vsel %vm2104, %v2097, %v2101
    %v2106 = vand.u32 2147483647, %v2095
    %vm2107 = vcmp.eq.f32.partialorder %v2106, 8.507059e+37
    %v2108 = vand.u32 %v2095, 2147483648
    %v2109 = vor.u32 1.1754944e-38, %v2108
    %v2110 = vsel %vm2107, %v2109, %v2105
    %v2111 = vmul.f32 1.0, %v2110
    %v2112 = vrcp.pop %v2096
    %v2113 = vmul.f32 %v2096, %v2112
    %v2114 = vsub.f32 1.0, %v2113
    %v2115 = vmul.f32 %v2112, %v2114
    %v2116 = vadd.f32 %v2112, %v2115
    %vm2117 = vweird.f32 %v2096
    %vm2118 = vweird.f32 %v2112
    %vm2119 = vmor %vm2117, %vm2118
    %v2120 = vsel %vm2119, %v2112, %v2116
    %v2121 = vand.u32 2147483647, %v2096
    %vm2122 = vcmp.eq.f32.partialorder %v2121, 8.507059e+37
    %v2123 = vand.u32 %v2096, 2147483648
    %v2124 = vor.u32 1.1754944e-38, %v2123
    %v2125 = vsel %vm2122, %v2124, %v2120
    %v2126 = vmul.f32 1.0, %v2125
    %v2127 = vxor.u32 %v2082, 2147483648
    %v2128 = vxor.u32 %v2086, 2147483648
    %v2129 = vmul.f32 %v2127, 1.442695
    %v2130 = vpow.pop %v2129
    %v2131 = vmul.f32 %v2128, 1.442695
    %v2132 = vpow.pop %v2131
    %v2133 = vadd.f32 %v2130, 1.0
    %v2134 = vadd.f32 %v2132, 1.0
    %v2135 = vrcp.pop %v2133
    %v2136 = vmul.f32 %v2133, %v2135
    %v2137 = vsub.f32 1.0, %v2136
    %v2138 = vmul.f32 %v2135, %v2137
    %v2139 = vadd.f32 %v2135, %v2138
    %vm2140 = vweird.f32 %v2133
    %vm2141 = vweird.f32 %v2135
    %vm2142 = vmor %vm2140, %vm2141
    %v2143 = vsel %vm2142, %v2135, %v2139
    %v2144 = vand.u32 2147483647, %v2133
    %vm2145 = vcmp.eq.f32.partialorder %v2144, 8.507059e+37
    %v2146 = vand.u32 %v2133, 2147483648
    %v2147 = vor.u32 1.1754944e-38, %v2146
    %v2148 = vsel %vm2145, %v2147, %v2143
    %v2149 = vmul.f32 1.0, %v2148
    %v2150 = vrcp.pop %v2134
    %v2151 = vmul.f32 %v2134, %v2150
    %v2152 = vsub.f32 1.0, %v2151
    %v2153 = vmul.f32 %v2150, %v2152
    %v2154 = vadd.f32 %v2150, %v2153
    %vm2155 = vweird.f32 %v2134
    %vm2156 = vweird.f32 %v2150
    %vm2157 = vmor %vm2155, %vm2156
    %v2158 = vsel %vm2157, %v2150, %v2154
    %v2159 = vand.u32 2147483647, %v2134
    %vm2160 = vcmp.eq.f32.partialorder %v2159, 8.507059e+37
    %v2161 = vand.u32 %v2134, 2147483648
    %v2162 = vor.u32 1.1754944e-38, %v2161
    %v2163 = vsel %vm2160, %v2162, %v2158
    %v2164 = vmul.f32 1.0, %v2163
    %v2165 = vtanh.pop %v2083
    %v2166 = vtanh.pop %v2087
    %v2167 = vxor.u32 %v2084, 2147483648
    %v2168 = vxor.u32 %v2088, 2147483648
    %v2169 = vmul.f32 %v2167, 1.442695
    %v2170 = vpow.pop %v2169
    %v2171 = vmul.f32 %v2168, 1.442695
    %v2172 = vpow.pop %v2171
    %v2173 = vadd.f32 %v2170, 1.0
    %v2174 = vadd.f32 %v2172, 1.0
    %v2175 = vrcp.pop %v2173
    %v2176 = vmul.f32 %v2173, %v2175
    %v2177 = vsub.f32 1.0, %v2176
    %v2178 = vmul.f32 %v2175, %v2177
    %v2179 = vadd.f32 %v2175, %v2178
    %vm2180 = vweird.f32 %v2173
    %vm2181 = vweird.f32 %v2175
    %vm2182 = vmor %vm2180, %vm2181
    %v2183 = vsel %vm2182, %v2175, %v2179
    %v2184 = vand.u32 2147483647, %v2173
    %vm2185 = vcmp.eq.f32.partialorder %v2184, 8.507059e+37
    %v2186 = vand.u32 %v2173, 2147483648
    %v2187 = vor.u32 1.1754944e-38, %v2186
    %v2188 = vsel %vm2185, %v2187, %v2183
    %v2189 = vmul.f32 1.0, %v2188
    %v2190 = vrcp.pop %v2174
    %v2191 = vmul.f32 %v2174, %v2190
    %v2192 = vsub.f32 1.0, %v2191
    %v2193 = vmul.f32 %v2190, %v2192
    %v2194 = vadd.f32 %v2190, %v2193
    %vm2195 = vweird.f32 %v2174
    %vm2196 = vweird.f32 %v2190
    %vm2197 = vmor %vm2195, %vm2196
    %v2198 = vsel %vm2197, %v2190, %v2194
    %v2199 = vand.u32 2147483647, %v2174
    %vm2200 = vcmp.eq.f32.partialorder %v2199, 8.507059e+37
    %v2201 = vand.u32 %v2174, 2147483648
    %v2202 = vor.u32 1.1754944e-38, %v2201
    %v2203 = vsel %vm2200, %v2202, %v2198
    %v2204 = vmul.f32 1.0, %v2203
    %v2205 = vmul.f32 %v2149, %v2009
    %v2206 = vmul.f32 %v2164, %v2010
    %v2207 = vmul.f32 %v2111, %v2165
    %v2208 = vmul.f32 %v2126, %v2166
    %v2209 = vadd.f32 %v2205, %v2207
    %v2210 = vadd.f32 %v2206, %v2208
    %v2211 = vtanh.pop %v2209
    %v2212 = vtanh.pop %v2210
    %v2213 = vmul.f32 %v2189, %v2211
    %v2214 = vmul.f32 %v2204, %v2212
    %2215 = vst [vmem:[#allocation3] sm:$0xff] %v2213
    %2216 = vst [vmem:[#allocation3 + $0x8] sm:$0xff] %v2214
    %2217 = vst [vmem:[#allocation4] sm:$0xff] %v2209
    %2218 = vst [vmem:[#allocation4 + $0x8] sm:$0xff] %v2210
    // Predicated region
    $region34: #{tpu_custom_call.1} parent=1 // pred_check
      %p2219 = pneg %p41
    $region35: #{tpu_custom_call.1} parent=1 // pred_check_branch
      %2221 = sbr.rel (%p2219) target = $region37
    $region36: #{tpu_custom_call.1} parent=1 // pred_region
      %v2222 = vld [vmem:[#allocation3] sm:$0xff]
      %v2223 = vld [vmem:[#allocation3 + $0x8] sm:$0xff]
      %2224 = vst [vmem:[#allocation8] sm:$0xff] %v2222
      %2225 = vst [vmem:[#allocation8 + $0x8] sm:$0xff] %v2223
    $region37: #{tpu_custom_call.1} parent=1 // pred_fallthru
      _
    // Predicated region
    $region38: #{tpu_custom_call.1} parent=1 // pred_check
      _
    $region39: #{tpu_custom_call.1} parent=1 // pred_check_branch
      %2227 = sbr.rel (0) target = $region41
    $region40: #{tpu_custom_call.1} parent=1 // pred_region
      %2229 = vsyncadd [#allocation7], 0
      %s2230 = sshll.u32 [#allocation8], 4
      %s2231 = int_to_ptr.vmem [resolvable:$true] %s2230
      %s2232 = sshll.u32 %s6, 4
      %s2233 = int_to_ptr.hbm [resolvable:$true] %s2232
      %2238 = dma.vmem_to_hbm [thread:$0]  %s2231, 256, %s2233, [#allocation7], 128, 128, 8
    $region41: #{tpu_custom_call.1} parent=1 // pred_fallthru
      _
    // Predicated region
    $region42: #{tpu_custom_call.1} parent=1 // pred_check
      _
    $region43: #{tpu_custom_call.1} parent=1 // pred_check_branch
      %2240 = sbr.rel (0) target = $region45
    $region44: #{tpu_custom_call.1} parent=1 // pred_region
      %2242 = dma.done [#allocation7], 256
    $region45: #{tpu_custom_call.1} parent=1 // pred_fallthru
      _
    %2243 = vsyncpa [#allocation6], 1
    %2244 = vsyncpa [#allocation7], 1

</llo_original>
